<compile_context>
chip_gen: v7x
topology: tpu7x:2x2x1
jax: 0.10.0
libtpu: 0.0.40
codegen_flags: <defaults>
</compile_context>

<pallas_src>
import functools
import math

import jax
import jax.numpy as jnp
from jax.experimental import pallas as pl
from jax.experimental.pallas import tpu as pltpu


def _pick_tile(n, max_tile):
    """Largest tile <= max_tile that divides n (power-of-two-ish), else full n."""
    for t in (512, 256, 128, 64, 32, 16, 8):
        if t <= max_tile and t <= n and n % t == 0:
            return t
    return n


# ---------------------------------------------------------------------------
# Kernel 1: fused QKV projection over flattened tokens (de-interleaved weights)
# ---------------------------------------------------------------------------
def _qkv_proj_kernel(x_ref, wq_ref, wk_ref, wv_ref, bq_ref, bk_ref, bv_ref,
                     q_ref, k_ref, v_ref, *, scale):
    x = x_ref[...]                                            # (tr, Din) bf16
    # bf16 MXU matmuls with f32 accumulation; bias add once per tile.
    q = jnp.dot(x, wq_ref[...], preferred_element_type=jnp.float32) + bq_ref[0]
    k = jnp.dot(x, wk_ref[...], preferred_element_type=jnp.float32) + bk_ref[0]
    v = jnp.dot(x, wv_ref[...], preferred_element_type=jnp.float32) + bv_ref[0]
    # Fold the 1/sqrt(head_dim) scale into Q once (cheaper than scaling scores).
    q_ref[...] = (q * scale).astype(q_ref.dtype)
    k_ref[...] = k.astype(k_ref.dtype)
    v_ref[...] = v.astype(v_ref.dtype)


# ---------------------------------------------------------------------------
# Kernel 2: head-batched flash attention + fused output projection
# ---------------------------------------------------------------------------
def _flash_attn_out_kernel(q_ref, k_ref, v_ref, wo_ref, bo_ref, o_ref,
                           m_scr, l_scr, acc_scr, *, num_heads, head_dim):
    ki = pl.program_id(2)
    nk = pl.num_programs(2)

    @pl.when(ki == 0)
    def _init():
        m_scr[...] = jnp.full_like(m_scr, -jnp.inf)
        l_scr[...] = jnp.zeros_like(l_scr)
        acc_scr[...] = jnp.zeros_like(acc_scr)

    q = q_ref[0]                     # (H, tq, hd) bf16, already scaled
    k = k_ref[0]                     # (H, tk, hd) bf16
    v = v_ref[0]                     # (H, tk, hd) bf16

    # Head-batched scores; softmax math stays in f32.
    s = jnp.einsum('hqd,hkd->hqk', q, k,
                   preferred_element_type=jnp.float32)        # (H, tq, tk)

    m_prev = m_scr[...]
    m_new = jnp.maximum(m_prev, s.max(axis=-1, keepdims=True))
    alpha = jnp.exp(m_prev - m_new)
    p = jnp.exp(s - m_new)                                    # (H, tq, tk) f32
    l_scr[...] = alpha * l_scr[...] + p.sum(axis=-1, keepdims=True)
    acc_scr[...] = alpha * acc_scr[...] + jnp.einsum(
        'hqk,hkd->hqd', p.astype(v.dtype), v,
        preferred_element_type=jnp.float32)                   # (H, tq, hd)
    m_scr[...] = m_new

    @pl.when(ki == nk - 1)
    def _finalize():
        # Normalize AFTER p@v (H*tq*hd multiplies, not H*tq*tk); EUP reciprocal.
        inv_l = pl.reciprocal(l_scr[...], approx=True)        # (H, tq, 1)
        vals = (acc_scr[...] * inv_l).astype(wo_ref.dtype)    # (H, tq, hd) bf16
        tq = vals.shape[1]
        e_out = wo_ref.shape[1]
        # Output projection: sum_h vals[h] @ Wo[h*hd:(h+1)*hd, :]  -- no concat,
        # bounded live ranges, sublane-aligned static weight row-slabs.
        out = jnp.zeros((tq, e_out), jnp.float32)
        for h in range(num_heads):
            out = out + jnp.dot(
                vals[h], wo_ref[h * head_dim:(h + 1) * head_dim, :],
                preferred_element_type=jnp.float32)
        # Single lane-dense (tq, E) store; bias broadcast once per query tile.
        o_ref[0] = (out + bo_ref[0]).astype(o_ref.dtype)

    # TODO(synk): attn_mask and dropout_p > 0 paths are not implemented
    # (forward is reproduced for mask=None, dropout=0.0).


# ---------------------------------------------------------------------------
# Wrapper
# ---------------------------------------------------------------------------
@functools.partial(jax.jit, static_argnames=("num_heads",))
def multihead_self_attention(x, w_qkv, b_qkv, w_o, b_o, *, num_heads):
    """Forward pass of MultiheadSelfAttention (mask=None, dropout=0.0).

    x:     [B, S, Din]
    w_qkv: [3*E, Din]   (torch nn.Linear weight layout)
    b_qkv: [3*E]
    w_o:   [E, E]       (torch nn.Linear weight layout)
    b_o:   [E]
    """
    B, S, Din = x.shape
    three_E = w_qkv.shape[0]
    E = three_E // 3
    hd = E // num_heads
    scale = hd ** (-0.5)
    compute_dtype = jnp.bfloat16

    # ---- host/XLA-side weight de-interleave (layout plumbing, not compute) ---
    # torch convention: column c of (x @ W^T) -> head h = c // (3*hd), then
    # chunk(3) within the head.  Split into lane-dense Q / K / V slabs.
    w_t = w_qkv.T                                             # (Din, 3E)
    w4 = w_t.reshape(Din, num_heads, 3, hd)
    wq = w4[:, :, 0, :].reshape(Din, E).astype(compute_dtype)
    wk = w4[:, :, 1, :].reshape(Din, E).astype(compute_dtype)
    wv = w4[:, :, 2, :].reshape(Din, E).astype(compute_dtype)
    b4 = b_qkv.reshape(num_heads, 3, hd)
    bq = b4[:, 0, :].reshape(1, E).astype(jnp.float32)
    bk = b4[:, 1, :].reshape(1, E).astype(jnp.float32)
    bv = b4[:, 2, :].reshape(1, E).astype(jnp.float32)
    wo = w_o.T.astype(compute_dtype)                          # (E_in, E_out)
    bo = b_o.reshape(1, E).astype(jnp.float32)

    # ---- kernel 1: QKV projection over flattened tokens ----------------------
    x_flat = x.reshape(B * S, Din).astype(compute_dtype)
    tr = _pick_tile(B * S, 512)
    q_f, k_f, v_f = pl.pallas_call(
        functools.partial(_qkv_proj_kernel, scale=scale),
        out_shape=[jax.ShapeDtypeStruct((B * S, E), compute_dtype)] * 3,
        grid_spec=pltpu.PrefetchScalarGridSpec(
            num_scalar_prefetch=0,
            grid=(B * S // tr,),
            in_specs=[
                pl.BlockSpec((tr, Din), lambda i: (i, 0)),
                # constant-index weight/bias blocks stay VMEM-resident
                pl.BlockSpec((Din, E), lambda i: (0, 0)),
                pl.BlockSpec((Din, E), lambda i: (0, 0)),
                pl.BlockSpec((Din, E), lambda i: (0, 0)),
                pl.BlockSpec((1, E), lambda i: (0, 0)),
                pl.BlockSpec((1, E), lambda i: (0, 0)),
                pl.BlockSpec((1, E), lambda i: (0, 0)),
            ],
            out_specs=[pl.BlockSpec((tr, E), lambda i: (i, 0))] * 3,
        ),
        compiler_params=pltpu.CompilerParams(
            dimension_semantics=("parallel",)),
    )(x_flat, wq, wk, wv, bq, bk, bv)

    # ---- host/XLA layout plumbing: token-major -> head-major -----------------
    def _to_heads(t):
        return t.reshape(B, S, num_heads, hd).transpose(0, 2, 1, 3)  # (B,H,S,hd)

    q_h, k_h, v_h = _to_heads(q_f), _to_heads(k_f), _to_heads(v_f)

    # ---- kernel 2: flash attention + fused output projection -----------------
    tq = _pick_tile(S, 256)
    tk = _pick_tile(S, 256)
    out = pl.pallas_call(
        functools.partial(_flash_attn_out_kernel,
                          num_heads=num_heads, head_dim=hd),
        out_shape=jax.ShapeDtypeStruct((B, S, E), x.dtype),
        grid_spec=pltpu.PrefetchScalarGridSpec(
            num_scalar_prefetch=0,
            grid=(B, S // tq, S // tk),
            in_specs=[
                pl.BlockSpec((1, num_heads, tq, hd),
                             lambda b, qi, ki: (b, 0, qi, 0)),
                pl.BlockSpec((1, num_heads, tk, hd),
                             lambda b, qi, ki: (b, 0, ki, 0)),
                pl.BlockSpec((1, num_heads, tk, hd),
                             lambda b, qi, ki: (b, 0, ki, 0)),
                pl.BlockSpec((E, E), lambda b, qi, ki: (0, 0)),
                pl.BlockSpec((1, E), lambda b, qi, ki: (0, 0)),
            ],
            out_specs=pl.BlockSpec((1, tq, E), lambda b, qi, ki: (b, qi, 0)),
            scratch_shapes=[
                pltpu.VMEM((num_heads, tq, 1), jnp.float32),   # running max m
                pltpu.VMEM((num_heads, tq, 1), jnp.float32),   # running sum l
                pltpu.VMEM((num_heads, tq, hd), jnp.float32),  # acc = p@v
            ],
        ),
        compiler_params=pltpu.CompilerParams(
            # batch & query-tile axes parallel (feeds both v7x TensorCores),
            # KV reduction axis arbitrary (innermost, accumulates in scratch).
            dimension_semantics=("parallel", "parallel", "arbitrary"),
            # explicit VMEM budget with headroom for v7x's 64 MiB physical VMEM
            vmem_limit_bytes=48 * 1024 * 1024,
        ),
    )(q_h, k_h, v_h, wo, bo)
    return out


# ---------------------------------------------------------------------------
# Reference + test
# ---------------------------------------------------------------------------
def _xavier_uniform(key, fan_out, fan_in, dtype=jnp.float32):
    # matches torch.nn.init.xavier_uniform_ on a weight of shape [out, in]
    bound = math.sqrt(6.0 / (fan_in + fan_out))
    return jax.random.uniform(key, (fan_out, fan_in), dtype=dtype,
                              minval=-bound, maxval=bound)


def _reference(x, w_qkv, b_qkv, w_o, b_o, num_heads):
    """Pure-JAX f32 mirror of the torch module (mask=None, dropout=0)."""
    B, S, Din = x.shape
    three_E = w_qkv.shape[0]
    E = three_E // 3
    hd = E // num_heads
    qkv = jnp.einsum('bsd,ed->bse', x, w_qkv) + b_qkv          # x @ W^T + b
    qkv = qkv.reshape(B, S, num_heads, 3 * hd).transpose(0, 2, 1, 3)
    q, k, v = qkv[..., :hd], qkv[..., hd:2 * hd], qkv[..., 2 * hd:]
    s = jnp.einsum('bhqd,bhkd->bhqk', q, k) * (hd ** -0.5)
    a = jax.nn.softmax(s, axis=-1)
    vals = jnp.einsum('bhqk,bhkd->bhqd', a, v)
    vals = vals.transpose(0, 2, 1, 3).reshape(B, S, E)
    return jnp.einsum('bse,fe->bsf', vals, w_o) + b_o


if __name__ == "__main__":
    B, S = 2, 16
    input_dim, embed_dim, num_heads = 32, 32, 4

    key = jax.random.PRNGKey(0)
    kx, kqkv, ko = jax.random.split(key, 3)

    x = jax.random.normal(kx, (B, S, input_dim), dtype=jnp.float32)

    # deterministic parameters, torch layout (xavier_uniform weights, zero bias)
    w_qkv = _xavier_uniform(kqkv, 3 * embed_dim, input_dim)    # [3E, Din]
    b_qkv = jnp.zeros((3 * embed_dim,), jnp.float32)
    w_o = _xavier_uniform(ko, embed_dim, embed_dim)            # [E, E]
    b_o = jnp.zeros((embed_dim,), jnp.float32)

    out = multihead_self_attention(x, w_qkv, b_qkv, w_o, b_o,
                                   num_heads=num_heads)
    out = jax.block_until_ready(out)

    ref = _reference(x, w_qkv, b_qkv, w_o, b_o, num_heads)
    assert out.shape == (B, S, embed_dim)
    # bf16 MXU operands + approx reciprocal => looser tolerance than pure f32
    assert jnp.allclose(out, ref, atol=5e-2, rtol=5e-2), "mismatch vs reference"

    print("KERNEL_OK")
</pallas_src>

<mosaic_0001>
module attributes {stable_mosaic.version = 11 : i64} {
  func.func @_qkv_proj_kernel(%arg0: i32, %arg1: memref<32x32xbf16, #tpu.memory_space<vmem>>, %arg2: memref<32x32xbf16, #tpu.memory_space<vmem>>, %arg3: memref<32x32xbf16, #tpu.memory_space<vmem>>, %arg4: memref<32x32xbf16, #tpu.memory_space<vmem>>, %arg5: memref<1x32xf32, #tpu.memory_space<vmem>>, %arg6: memref<1x32xf32, #tpu.memory_space<vmem>>, %arg7: memref<1x32xf32, #tpu.memory_space<vmem>>, %arg8: memref<32x32xbf16, #tpu.memory_space<vmem>>, %arg9: memref<32x32xbf16, #tpu.memory_space<vmem>>, %arg10: memref<32x32xbf16, #tpu.memory_space<vmem>>) attributes {dimension_semantics = [#tpu.dimension_semantics<parallel>], iteration_bounds = array<i64: 1>, scalar_prefetch = 0 : i64, scratch_operands = 0 : i64, tpu.core_type = #tpu.core_type<tc>, window_params = [{transform_indices = @transform_0, window_bounds = array<i64: 32, 32>}, {pipeline_mode = #tpu.pipeline_mode<synchronous>, transform_indices = @transform_1, window_bounds = array<i64: 32, 32>}, {pipeline_mode = #tpu.pipeline_mode<synchronous>, transform_indices = @transform_2, window_bounds = array<i64: 32, 32>}, {pipeline_mode = #tpu.pipeline_mode<synchronous>, transform_indices = @transform_3, window_bounds = array<i64: 32, 32>}, {pipeline_mode = #tpu.pipeline_mode<synchronous>, transform_indices = @transform_4, window_bounds = array<i64: 1, 32>}, {pipeline_mode = #tpu.pipeline_mode<synchronous>, transform_indices = @transform_5, window_bounds = array<i64: 1, 32>}, {pipeline_mode = #tpu.pipeline_mode<synchronous>, transform_indices = @transform_6, window_bounds = array<i64: 1, 32>}, {transform_indices = @transform_7, window_bounds = array<i64: 32, 32>}, {transform_indices = @transform_8, window_bounds = array<i64: 32, 32>}, {transform_indices = @transform_9, window_bounds = array<i64: 32, 32>}]} {
    %c0 = arith.constant 0 : index
    %c0_0 = arith.constant 0 : index
    %0 = vector.load %arg1[%c0, %c0_0] : memref<32x32xbf16, #tpu.memory_space<vmem>>, vector<32x32xbf16>
    %c0_1 = arith.constant 0 : index
    %c0_2 = arith.constant 0 : index
    %1 = vector.load %arg2[%c0_1, %c0_2] : memref<32x32xbf16, #tpu.memory_space<vmem>>, vector<32x32xbf16>
    %cst = arith.constant dense<0.000000e+00> : vector<32x32xf32>
    %2 = tpu.matmul %0, %1, %cst {dimension_numbers = #tpu.dot_dimension_numbers<[1], [0], [0], [1], [0, 0, 1, 1], [], []>} : vector<32x32xbf16>, vector<32x32xbf16>, vector<32x32xf32> -> vector<32x32xf32>
    %c0_3 = arith.constant 0 : index
    %c0_4 = arith.constant 0 : index
    %3 = vector.load %arg5[%c0_3, %c0_4] : memref<1x32xf32, #tpu.memory_space<vmem>>, vector<1x32xf32>
    %4 = vector.shape_cast %3 : vector<1x32xf32> to vector<32xf32>
    %5 = vector.shape_cast %4 : vector<32xf32> to vector<1x32xf32>
    %6 = vector.broadcast %5 : vector<1x32xf32> to vector<32x32xf32>
    %7 = arith.addf %2, %6 : vector<32x32xf32>
    %c0_5 = arith.constant 0 : index
    %c0_6 = arith.constant 0 : index
    %8 = vector.load %arg3[%c0_5, %c0_6] : memref<32x32xbf16, #tpu.memory_space<vmem>>, vector<32x32xbf16>
    %cst_7 = arith.constant dense<0.000000e+00> : vector<32x32xf32>
    %9 = tpu.matmul %0, %8, %cst_7 {dimension_numbers = #tpu.dot_dimension_numbers<[1], [0], [0], [1], [0, 0, 1, 1], [], []>} : vector<32x32xbf16>, vector<32x32xbf16>, vector<32x32xf32> -> vector<32x32xf32>
    %c0_8 = arith.constant 0 : index
    %c0_9 = arith.constant 0 : index
    %10 = vector.load %arg6[%c0_8, %c0_9] : memref<1x32xf32, #tpu.memory_space<vmem>>, vector<1x32xf32>
    %11 = vector.shape_cast %10 : vector<1x32xf32> to vector<32xf32>
    %12 = vector.shape_cast %11 : vector<32xf32> to vector<1x32xf32>
    %13 = vector.broadcast %12 : vector<1x32xf32> to vector<32x32xf32>
    %14 = arith.addf %9, %13 : vector<32x32xf32>
    %c0_10 = arith.constant 0 : index
    %c0_11 = arith.constant 0 : index
    %15 = vector.load %arg4[%c0_10, %c0_11] : memref<32x32xbf16, #tpu.memory_space<vmem>>, vector<32x32xbf16>
    %cst_12 = arith.constant dense<0.000000e+00> : vector<32x32xf32>
    %16 = tpu.matmul %0, %15, %cst_12 {dimension_numbers = #tpu.dot_dimension_numbers<[1], [0], [0], [1], [0, 0, 1, 1], [], []>} : vector<32x32xbf16>, vector<32x32xbf16>, vector<32x32xf32> -> vector<32x32xf32>
    %c0_13 = arith.constant 0 : index
    %c0_14 = arith.constant 0 : index
    %17 = vector.load %arg7[%c0_13, %c0_14] : memref<1x32xf32, #tpu.memory_space<vmem>>, vector<1x32xf32>
    %18 = vector.shape_cast %17 : vector<1x32xf32> to vector<32xf32>
    %19 = vector.shape_cast %18 : vector<32xf32> to vector<1x32xf32>
    %20 = vector.broadcast %19 : vector<1x32xf32> to vector<32x32xf32>
    %21 = arith.addf %16, %20 : vector<32x32xf32>
    %cst_15 = arith.constant 0.353553385 : f32
    %22 = vector.broadcast %cst_15 : f32 to vector<32x32xf32>
    %23 = arith.mulf %7, %22 : vector<32x32xf32>
    %24 = arith.truncf %23 : vector<32x32xf32> to vector<32x32xbf16>
    %c0_16 = arith.constant 0 : index
    %c0_17 = arith.constant 0 : index
    %25 = vector.load %arg8[%c0_16, %c0_17] : memref<32x32xbf16, #tpu.memory_space<vmem>>, vector<32x32xbf16>
    tpu.vector_store %arg8[%c0_16, %c0_17], %24 {strides = array<i32>} : memref<32x32xbf16, #tpu.memory_space<vmem>>, vector<32x32xbf16>,
    %26 = arith.truncf %14 : vector<32x32xf32> to vector<32x32xbf16>
    %c0_18 = arith.constant 0 : index
    %c0_19 = arith.constant 0 : index
    %27 = vector.load %arg9[%c0_18, %c0_19] : memref<32x32xbf16, #tpu.memory_space<vmem>>, vector<32x32xbf16>
    tpu.vector_store %arg9[%c0_18, %c0_19], %26 {strides = array<i32>} : memref<32x32xbf16, #tpu.memory_space<vmem>>, vector<32x32xbf16>,
    %28 = arith.truncf %21 : vector<32x32xf32> to vector<32x32xbf16>
    %c0_20 = arith.constant 0 : index
    %c0_21 = arith.constant 0 : index
    %29 = vector.load %arg10[%c0_20, %c0_21] : memref<32x32xbf16, #tpu.memory_space<vmem>>, vector<32x32xbf16>
    tpu.vector_store %arg10[%c0_20, %c0_21], %28 {strides = array<i32>} : memref<32x32xbf16, #tpu.memory_space<vmem>>, vector<32x32xbf16>,
    return
  }
  func.func @transform_0(%arg0: i32) -> (i32, i32) {
    %c0_i32 = arith.constant 0 : i32
    %c0_i32_0 = arith.constant 0 : i32
    return %arg0, %c0_i32 : i32, i32
  }
  func.func @transform_1(%arg0: i32) -> (i32, i32) {
    %c0_i32 = arith.constant 0 : i32
    %c0_i32_0 = arith.constant 0 : i32
    %c0_i32_1 = arith.constant 0 : i32
    return %c0_i32, %c0_i32_0 : i32, i32
  }
  func.func @transform_2(%arg0: i32) -> (i32, i32) {
    %c0_i32 = arith.constant 0 : i32
    %c0_i32_0 = arith.constant 0 : i32
    %c0_i32_1 = arith.constant 0 : i32
    return %c0_i32, %c0_i32_0 : i32, i32
  }
  func.func @transform_3(%arg0: i32) -> (i32, i32) {
    %c0_i32 = arith.constant 0 : i32
    %c0_i32_0 = arith.constant 0 : i32
    %c0_i32_1 = arith.constant 0 : i32
    return %c0_i32, %c0_i32_0 : i32, i32
  }
  func.func @transform_4(%arg0: i32) -> (i32, i32) {
    %c0_i32 = arith.constant 0 : i32
    %c0_i32_0 = arith.constant 0 : i32
    %c0_i32_1 = arith.constant 0 : i32
    return %c0_i32, %c0_i32_0 : i32, i32
  }
  func.func @transform_5(%arg0: i32) -> (i32, i32) {
    %c0_i32 = arith.constant 0 : i32
    %c0_i32_0 = arith.constant 0 : i32
    %c0_i32_1 = arith.constant 0 : i32
    return %c0_i32, %c0_i32_0 : i32, i32
  }
  func.func @transform_6(%arg0: i32) -> (i32, i32) {
    %c0_i32 = arith.constant 0 : i32
    %c0_i32_0 = arith.constant 0 : i32
    %c0_i32_1 = arith.constant 0 : i32
    return %c0_i32, %c0_i32_0 : i32, i32
  }
  func.func @transform_7(%arg0: i32) -> (i32, i32) {
    %c0_i32 = arith.constant 0 : i32
    %c0_i32_0 = arith.constant 0 : i32
    return %arg0, %c0_i32 : i32, i32
  }
  func.func @transform_8(%arg0: i32) -> (i32, i32) {
    %c0_i32 = arith.constant 0 : i32
    %c0_i32_0 = arith.constant 0 : i32
    return %arg0, %c0_i32 : i32, i32
  }
  func.func @transform_9(%arg0: i32) -> (i32, i32) {
    %c0_i32 = arith.constant 0 : i32
    %c0_i32_0 = arith.constant 0 : i32
    return %arg0, %c0_i32 : i32, i32
  }
}

module attributes {stable_mosaic.version = 11 : i64} {
  func.func @_flash_attn_out_kernel(%arg0: i32, %arg1: i32, %arg2: i32, %arg3: memref<1x4x16x8xbf16, #tpu.memory_space<vmem>>, %arg4: memref<1x4x16x8xbf16, #tpu.memory_space<vmem>>, %arg5: memref<1x4x16x8xbf16, #tpu.memory_space<vmem>>, %arg6: memref<32x32xbf16, #tpu.memory_space<vmem>>, %arg7: memref<1x32xf32, #tpu.memory_space<vmem>>, %arg8: memref<1x16x32xf32, #tpu.memory_space<vmem>>, %arg9: memref<4x16x1xf32, #tpu.memory_space<vmem>>, %arg10: memref<4x16x1xf32, #tpu.memory_space<vmem>>, %arg11: memref<4x16x8xf32, #tpu.memory_space<vmem>>) attributes {dimension_semantics = [#tpu.dimension_semantics<parallel>, #tpu.dimension_semantics<parallel>, #tpu.dimension_semantics<arbitrary>], iteration_bounds = array<i64: 2, 1, 1>, scalar_prefetch = 0 : i64, scratch_operands = 3 : i64, tpu.core_type = #tpu.core_type<tc>, window_params = [{transform_indices = @transform_0, window_bounds = array<i64: 1, 4, 16, 8>}, {transform_indices = @transform_1, window_bounds = array<i64: 1, 4, 16, 8>}, {transform_indices = @transform_2, window_bounds = array<i64: 1, 4, 16, 8>}, {pipeline_mode = #tpu.pipeline_mode<synchronous>, transform_indices = @transform_3, window_bounds = array<i64: 32, 32>}, {pipeline_mode = #tpu.pipeline_mode<synchronous>, transform_indices = @transform_4, window_bounds = array<i64: 1, 32>}, {transform_indices = @transform_5, window_bounds = array<i64: 1, 16, 32>}]} {
    %c0_i32 = arith.constant 0 : i32
    %0 = arith.cmpi eq, %arg2, %c0_i32 : i32
    %1 = arith.extui %0 : i1 to i32
    %c0_i32_0 = arith.constant 0 : i32
    %2 = arith.cmpi ne, %1, %c0_i32_0 : i32
    scf.if %2 {
      %cst_35 = arith.constant 0xFF800000 : f32
      %36 = vector.broadcast %cst_35 : f32 to vector<4x16x1xf32>
      %c0_36 = arith.constant 0 : index
      %c0_37 = arith.constant 0 : index
      %c0_38 = arith.constant 0 : index
      %37 = vector.load %arg9[%c0_36, %c0_37, %c0_38] : memref<4x16x1xf32, #tpu.memory_space<vmem>>, vector<4x16x1xf32>
      tpu.vector_store %arg9[%c0_36, %c0_37, %c0_38], %36 {strides = array<i32>} : memref<4x16x1xf32, #tpu.memory_space<vmem>>, vector<4x16x1xf32>,
      %cst_39 = arith.constant 0.000000e+00 : f32
      %38 = vector.broadcast %cst_39 : f32 to vector<4x16x1xf32>
      %c0_40 = arith.constant 0 : index
      %c0_41 = arith.constant 0 : index
      %c0_42 = arith.constant 0 : index
      %39 = vector.load %arg10[%c0_40, %c0_41, %c0_42] : memref<4x16x1xf32, #tpu.memory_space<vmem>>, vector<4x16x1xf32>
      tpu.vector_store %arg10[%c0_40, %c0_41, %c0_42], %38 {strides = array<i32>} : memref<4x16x1xf32, #tpu.memory_space<vmem>>, vector<4x16x1xf32>,
      %cst_43 = arith.constant 0.000000e+00 : f32
      %40 = vector.broadcast %cst_43 : f32 to vector<4x16x8xf32>
      %c0_44 = arith.constant 0 : index
      %c0_45 = arith.constant 0 : index
      %c0_46 = arith.constant 0 : index
      %41 = vector.load %arg11[%c0_44, %c0_45, %c0_46] : memref<4x16x8xf32, #tpu.memory_space<vmem>>, vector<4x16x8xf32>
      tpu.vector_store %arg11[%c0_44, %c0_45, %c0_46], %40 {strides = array<i32>} : memref<4x16x8xf32, #tpu.memory_space<vmem>>, vector<4x16x8xf32>,
    } else {
    }
    %c0 = arith.constant 0 : index
    %c0_1 = arith.constant 0 : index
    %c0_2 = arith.constant 0 : index
    %c0_3 = arith.constant 0 : index
    %3 = vector.load %arg3[%c0, %c0_1, %c0_2, %c0_3] : memref<1x4x16x8xbf16, #tpu.memory_space<vmem>>, vector<1x4x16x8xbf16>
    %4 = vector.shape_cast %3 : vector<1x4x16x8xbf16> to vector<4x16x8xbf16>
    %c0_4 = arith.constant 0 : index
    %c0_5 = arith.constant 0 : index
    %c0_6 = arith.constant 0 : index
    %c0_7 = arith.constant 0 : index
    %5 = vector.load %arg4[%c0_4, %c0_5, %c0_6, %c0_7] : memref<1x4x16x8xbf16, #tpu.memory_space<vmem>>, vector<1x4x16x8xbf16>
    %6 = vector.shape_cast %5 : vector<1x4x16x8xbf16> to vector<4x16x8xbf16>
    %c0_8 = arith.constant 0 : index
    %c0_9 = arith.constant 0 : index
    %c0_10 = arith.constant 0 : index
    %c0_11 = arith.constant 0 : index
    %7 = vector.load %arg5[%c0_8, %c0_9, %c0_10, %c0_11] : memref<1x4x16x8xbf16, #tpu.memory_space<vmem>>, vector<1x4x16x8xbf16>
    %8 = vector.shape_cast %7 : vector<1x4x16x8xbf16> to vector<4x16x8xbf16>
    "tpu.trace_start"() <{level = 10 : i32, message = "hqd,hkd->hqk"}> : () -> ()
    %cst = arith.constant dense<0.000000e+00> : vector<4x16x16xf32>
    %9 = tpu.matmul %4, %6, %cst {dimension_numbers = #tpu.dot_dimension_numbers<[2], [2], [1], [1], [0, 0, 0, 1, 1, 1], [0], [0]>} : vector<4x16x8xbf16>, vector<4x16x8xbf16>, vector<4x16x16xf32> -> vector<4x16x16xf32>
    "tpu.trace_stop"() : () -> ()
    %c0_12 = arith.constant 0 : index
    %c0_13 = arith.constant 0 : index
    %c0_14 = arith.constant 0 : index
    %10 = vector.load %arg9[%c0_12, %c0_13, %c0_14] : memref<4x16x1xf32, #tpu.memory_space<vmem>>, vector<4x16x1xf32>
    %cst_15 = arith.constant dense<0xFF800000> : vector<4x16xf32>
    %11 = vector.multi_reduction <maximumf>, %9, %cst_15 [2] : vector<4x16x16xf32> to vector<4x16xf32>
    %12 = vector.shape_cast %11 : vector<4x16xf32> to vector<4x16x1xf32>
    %13 = arith.maximumf %10, %12 : vector<4x16x1xf32>
    %14 = arith.subf %10, %13 : vector<4x16x1xf32>
    %15 = math.exp %14 : vector<4x16x1xf32>
    %16 = vector.broadcast %13 : vector<4x16x1xf32> to vector<4x16x16xf32>
    %17 = arith.subf %9, %16 : vector<4x16x16xf32>
    %18 = math.exp %17 : vector<4x16x16xf32>
    %c0_16 = arith.constant 0 : index
    %c0_17 = arith.constant 0 : index
    %c0_18 = arith.constant 0 : index
    %19 = vector.load %arg10[%c0_16, %c0_17, %c0_18] : memref<4x16x1xf32, #tpu.memory_space<vmem>>, vector<4x16x1xf32>
    %20 = arith.mulf %15, %19 : vector<4x16x1xf32>
    %cst_19 = arith.constant dense<0.000000e+00> : vector<4x16xf32>
    %21 = vector.multi_reduction <add>, %18, %cst_19 [2] : vector<4x16x16xf32> to vector<4x16xf32>
    %22 = vector.shape_cast %21 : vector<4x16xf32> to vector<4x16x1xf32>
    %23 = arith.addf %20, %22 : vector<4x16x1xf32>
    %c0_20 = arith.constant 0 : index
    %c0_21 = arith.constant 0 : index
    %c0_22 = arith.constant 0 : index
    %24 = vector.load %arg10[%c0_20, %c0_21, %c0_22] : memref<4x16x1xf32, #tpu.memory_space<vmem>>, vector<4x16x1xf32>
    tpu.vector_store %arg10[%c0_20, %c0_21, %c0_22], %23 {strides = array<i32>} : memref<4x16x1xf32, #tpu.memory_space<vmem>>, vector<4x16x1xf32>,
    %c0_23 = arith.constant 0 : index
    %c0_24 = arith.constant 0 : index
    %c0_25 = arith.constant 0 : index
    %25 = vector.load %arg11[%c0_23, %c0_24, %c0_25] : memref<4x16x8xf32, #tpu.memory_space<vmem>>, vector<4x16x8xf32>
    %26 = vector.broadcast %15 : vector<4x16x1xf32> to vector<4x16x8xf32>
    %27 = arith.mulf %26, %25 : vector<4x16x8xf32>
    %28 = arith.truncf %18 : vector<4x16x16xf32> to vector<4x16x16xbf16>
    "tpu.trace_start"() <{level = 10 : i32, message = "hqk,hkd->hqd"}> : () -> ()
    %cst_26 = arith.constant dense<0.000000e+00> : vector<4x16x8xf32>
    %29 = tpu.matmul %28, %8, %cst_26 {dimension_numbers = #tpu.dot_dimension_numbers<[2], [1], [1], [2], [0, 0, 0, 1, 1, 2], [0], [0]>} : vector<4x16x16xbf16>, vector<4x16x8xbf16>, vector<4x16x8xf32> -> vector<4x16x8xf32>
    "tpu.trace_stop"() : () -> ()
    %30 = arith.addf %27, %29 : vector<4x16x8xf32>
    %c0_27 = arith.constant 0 : index
    %c0_28 = arith.constant 0 : index
    %c0_29 = arith.constant 0 : index
    %31 = vector.load %arg11[%c0_27, %c0_28, %c0_29] : memref<4x16x8xf32, #tpu.memory_space<vmem>>, vector<4x16x8xf32>
    tpu.vector_store %arg11[%c0_27, %c0_28, %c0_29], %30 {strides = array<i32>} : memref<4x16x8xf32, #tpu.memory_space<vmem>>, vector<4x16x8xf32>,
    %c0_30 = arith.constant 0 : index
    %c0_31 = arith.constant 0 : index
    %c0_32 = arith.constant 0 : index
    %32 = vector.load %arg9[%c0_30, %c0_31, %c0_32] : memref<4x16x1xf32, #tpu.memory_space<vmem>>, vector<4x16x1xf32>
    tpu.vector_store %arg9[%c0_30, %c0_31, %c0_32], %13 {strides = array<i32>} : memref<4x16x1xf32, #tpu.memory_space<vmem>>, vector<4x16x1xf32>,
    %c0_i32_33 = arith.constant 0 : i32
    %33 = arith.cmpi eq, %arg2, %c0_i32_33 : i32
    %34 = arith.extui %33 : i1 to i32
    %c0_i32_34 = arith.constant 0 : i32
    %35 = arith.cmpi ne, %34, %c0_i32_34 : i32
    scf.if %35 {
      %c0_35 = arith.constant 0 : index
      %c0_36 = arith.constant 0 : index
      %c0_37 = arith.constant 0 : index
      %36 = vector.load %arg10[%c0_35, %c0_36, %c0_37] : memref<4x16x1xf32, #tpu.memory_space<vmem>>, vector<4x16x1xf32>
      %37 = tpu.reciprocal %36 {approx = true} : vector<4x16x1xf32> -> vector<4x16x1xf32>
      %c0_38 = arith.constant 0 : index
      %c0_39 = arith.constant 0 : index
      %c0_40 = arith.constant 0 : index
      %38 = vector.load %arg11[%c0_38, %c0_39, %c0_40] : memref<4x16x8xf32, #tpu.memory_space<vmem>>, vector<4x16x8xf32>
      %39 = vector.broadcast %37 : vector<4x16x1xf32> to vector<4x16x8xf32>
      %40 = arith.mulf %38, %39 : vector<4x16x8xf32>
      %41 = arith.truncf %40 : vector<4x16x8xf32> to vector<4x16x8xbf16>
      %cst_41 = arith.constant 0.000000e+00 : f32
      %42 = vector.broadcast %cst_41 : f32 to vector<16x32xf32>
      %43 = vector.extract_strided_slice %41 {offsets = [0, 0, 0], sizes = [1, 16, 8], strides = [1, 1, 1]} : vector<4x16x8xbf16> to vector<1x16x8xbf16>
      %44 = vector.shape_cast %43 : vector<1x16x8xbf16> to vector<16x8xbf16>
      %c0_42 = arith.constant 0 : index
      %c0_43 = arith.constant 0 : index
      %45 = vector.load %arg6[%c0_42, %c0_43] : memref<32x32xbf16, #tpu.memory_space<vmem>>, vector<8x32xbf16>
      %cst_44 = arith.constant dense<0.000000e+00> : vector<16x32xf32>
      %46 = tpu.matmul %44, %45, %cst_44 {dimension_numbers = #tpu.dot_dimension_numbers<[1], [0], [0], [1], [0, 0, 1, 1], [], []>} : vector<16x8xbf16>, vector<8x32xbf16>, vector<16x32xf32> -> vector<16x32xf32>
      %47 = arith.addf %42, %46 : vector<16x32xf32>
      %48 = vector.extract_strided_slice %41 {offsets = [1, 0, 0], sizes = [1, 16, 8], strides = [1, 1, 1]} : vector<4x16x8xbf16> to vector<1x16x8xbf16>
      %49 = vector.shape_cast %48 : vector<1x16x8xbf16> to vector<16x8xbf16>
      %c8 = arith.constant 8 : index
      %c0_45 = arith.constant 0 : index
      %50 = vector.load %arg6[%c8, %c0_45] : memref<32x32xbf16, #tpu.memory_space<vmem>>, vector<8x32xbf16>
      %cst_46 = arith.constant dense<0.000000e+00> : vector<16x32xf32>
      %51 = tpu.matmul %49, %50, %cst_46 {dimension_numbers = #tpu.dot_dimension_numbers<[1], [0], [0], [1], [0, 0, 1, 1], [], []>} : vector<16x8xbf16>, vector<8x32xbf16>, vector<16x32xf32> -> vector<16x32xf32>
      %52 = arith.addf %47, %51 : vector<16x32xf32>
      %53 = vector.extract_strided_slice %41 {offsets = [2, 0, 0], sizes = [1, 16, 8], strides = [1, 1, 1]} : vector<4x16x8xbf16> to vector<1x16x8xbf16>
      %54 = vector.shape_cast %53 : vector<1x16x8xbf16> to vector<16x8xbf16>
      %c16 = arith.constant 16 : index
      %c0_47 = arith.constant 0 : index
      %55 = vector.load %arg6[%c16, %c0_47] : memref<32x32xbf16, #tpu.memory_space<vmem>>, vector<8x32xbf16>
      %cst_48 = arith.constant dense<0.000000e+00> : vector<16x32xf32>
      %56 = tpu.matmul %54, %55, %cst_48 {dimension_numbers = #tpu.dot_dimension_numbers<[1], [0], [0], [1], [0, 0, 1, 1], [], []>} : vector<16x8xbf16>, vector<8x32xbf16>, vector<16x32xf32> -> vector<16x32xf32>
      %57 = arith.addf %52, %56 : vector<16x32xf32>
      %58 = vector.extract_strided_slice %41 {offsets = [3, 0, 0], sizes = [1, 16, 8], strides = [1, 1, 1]} : vector<4x16x8xbf16> to vector<1x16x8xbf16>
      %59 = vector.shape_cast %58 : vector<1x16x8xbf16> to vector<16x8xbf16>
      %c24 = arith.constant 24 : index
      %c0_49 = arith.constant 0 : index
      %60 = vector.load %arg6[%c24, %c0_49] : memref<32x32xbf16, #tpu.memory_space<vmem>>, vector<8x32xbf16>
      %cst_50 = arith.constant dense<0.000000e+00> : vector<16x32xf32>
      %61 = tpu.matmul %59, %60, %cst_50 {dimension_numbers = #tpu.dot_dimension_numbers<[1], [0], [0], [1], [0, 0, 1, 1], [], []>} : vector<16x8xbf16>, vector<8x32xbf16>, vector<16x32xf32> -> vector<16x32xf32>
      %62 = arith.addf %57, %61 : vector<16x32xf32>
      %c0_51 = arith.constant 0 : index
      %c0_52 = arith.constant 0 : index
      %63 = vector.load %arg7[%c0_51, %c0_52] : memref<1x32xf32, #tpu.memory_space<vmem>>, vector<1x32xf32>
      %64 = vector.shape_cast %63 : vector<1x32xf32> to vector<32xf32>
      %65 = vector.shape_cast %64 : vector<32xf32> to vector<1x32xf32>
      %66 = vector.broadcast %65 : vector<1x32xf32> to vector<16x32xf32>
      %67 = arith.addf %62, %66 : vector<16x32xf32>
      %c0_53 = arith.constant 0 : index
      %c0_54 = arith.constant 0 : index
      %c0_55 = arith.constant 0 : index
      %68 = vector.load %arg8[%c0_53, %c0_54, %c0_55] : memref<1x16x32xf32, #tpu.memory_space<vmem>>, vector<1x16x32xf32>
      %69 = vector.shape_cast %68 : vector<1x16x32xf32> to vector<16x32xf32>
      %70 = vector.shape_cast %67 : vector<16x32xf32> to vector<1x16x32xf32>
      tpu.vector_store %arg8[%c0_53, %c0_54, %c0_55], %70 {strides = array<i32>} : memref<1x16x32xf32, #tpu.memory_space<vmem>>, vector<1x16x32xf32>,
    } else {
    }
    return
  }
  func.func @transform_0(%arg0: i32, %arg1: i32, %arg2: i32) -> (i32, i32, i32, i32) {
    %c0_i32 = arith.constant 0 : i32
    %c0_i32_0 = arith.constant 0 : i32
    %c0_i32_1 = arith.constant 0 : i32
    return %arg0, %c0_i32, %arg1, %c0_i32_0 : i32, i32, i32, i32
  }
  func.func @transform_1(%arg0: i32, %arg1: i32, %arg2: i32) -> (i32, i32, i32, i32) {
    %c0_i32 = arith.constant 0 : i32
    %c0_i32_0 = arith.constant 0 : i32
    %c0_i32_1 = arith.constant 0 : i32
    return %arg0, %c0_i32, %arg2, %c0_i32_0 : i32, i32, i32, i32
  }
  func.func @transform_2(%arg0: i32, %arg1: i32, %arg2: i32) -> (i32, i32, i32, i32) {
    %c0_i32 = arith.constant 0 : i32
    %c0_i32_0 = arith.constant 0 : i32
    %c0_i32_1 = arith.constant 0 : i32
    return %arg0, %c0_i32, %arg2, %c0_i32_0 : i32, i32, i32, i32
  }
  func.func @transform_3(%arg0: i32, %arg1: i32, %arg2: i32) -> (i32, i32) {
    %c0_i32 = arith.constant 0 : i32
    %c0_i32_0 = arith.constant 0 : i32
    %c0_i32_1 = arith.constant 0 : i32
    return %c0_i32, %c0_i32_0 : i32, i32
  }
  func.func @transform_4(%arg0: i32, %arg1: i32, %arg2: i32) -> (i32, i32) {
    %c0_i32 = arith.constant 0 : i32
    %c0_i32_0 = arith.constant 0 : i32
    %c0_i32_1 = arith.constant 0 : i32
    return %c0_i32, %c0_i32_0 : i32, i32
  }
  func.func @transform_5(%arg0: i32, %arg1: i32, %arg2: i32) -> (i32, i32, i32) {
    %c0_i32 = arith.constant 0 : i32
    %c0_i32_0 = arith.constant 0 : i32
    return %arg0, %arg1, %c0_i32 : i32, i32, i32
  }
}

</mosaic_0001>

<llo_original>
// kernel: squeeze.11
$region0: #{squeeze.11}
  %s0 = inlined_call_operand.vmem [shape: f32[4,8], index: 0, kind: input, shape index: {}]
  %s1 = inlined_call_operand.vmem [shape: f32[1,32], index: 1, kind: output, shape index: {}]
  $region1: #{squeeze.11} parent=0
    #allocation0 [shape = 'u8[4096]{0}', space=vmem, size = 0x1000, scoped, tag = 'scoped mem for output reshape']
    #allocation1 [shape = 'u8[4096]{0}', space=vmem, size = 0x1000, scoped, tag = 'scoped mem for input reshape']
    %s3 = sshllo.u32 0, 4
    %v4 = vld [vmem:[%s0] sm:%s3]
    %5 = vst [vmem:[#allocation1] sm:%s3] %v4
    %v6 = vld [vmem:[#allocation1] sm:$0x1]
    %vm7 = vcmask 64512
    %8 = vst.msk [vmem:[#allocation0] sm:$0x1] %vm7, %v6
    %s9 = scalar_lea.vmem [#allocation1], 3
    %v10 = vld [vmem:[%s9] sm:$0x1]
    %11 = vrot.lane.b32.xlu0 %v10, 24
    %v12 = vpop.permute.xlu0 %11
    %vm13 = vcmask 261312
    %14 = vst.msk [vmem:[#allocation0] sm:$0x1] %vm13, %v12
    %s15 = scalar_lea.vmem [#allocation1], 2
    %v16 = vld [vmem:[%s15] sm:$0x1]
    %17 = vrot.lane.b32.xlu0 %v16, 16
    %v18 = vpop.permute.xlu0 %17
    %vm19 = vcmask 195712
    %20 = vst.msk [vmem:[#allocation0] sm:$0x1] %vm19, %v18
    %s21 = scalar_lea.vmem [#allocation1], 1
    %v22 = vld [vmem:[%s21] sm:$0x1]
    %23 = vrot.lane.b32.xlu0 %v22, 8
    %v24 = vpop.permute.xlu0 %23
    %vm25 = vcmask 130112
    %26 = vst.msk [vmem:[#allocation0] sm:$0x1] %vm25, %v24
    %s28 = sshllo.u32 0, 1
    %v30 = vld [vmem:[#allocation0] sm:%s28]
    %s31 = sshllo.u32 0, 1
    %32 = vst [vmem:[%s1] sm:%s31] %v30

// kernel: multihead_self_attention.2
$region0: #{multihead_self_attention.2}
  #allocation0 [shape = 'u32[]', space=smem, size = 0x4, offset = 0x4, fixed_abs, tag = 'smem constant byte address 0x4 - core index']
  #allocation1 [shape = 'u32[144,128]{1,0:T(1,128)}', space=vmem, size = 0x12000, scoped, tag = 'internal scratch']
  %s0 = inlined_call_operand.vmem [shape: bf16[32,32], index: 0, kind: input, shape index: {}]
  %s1 = inlined_call_operand.vmem [shape: bf16[32,32], index: 1, kind: input, shape index: {}]
  %s2 = inlined_call_operand.vmem [shape: bf16[32,32], index: 2, kind: input, shape index: {}]
  %s3 = inlined_call_operand.vmem [shape: bf16[32,32], index: 3, kind: input, shape index: {}]
  %s4 = inlined_call_operand.vmem [shape: f32[1,32], index: 4, kind: input, shape index: {}]
  %s5 = inlined_call_operand.vmem [shape: f32[1,32], index: 5, kind: input, shape index: {}]
  %s6 = inlined_call_operand.vmem [shape: f32[1,32], index: 6, kind: input, shape index: {}]
  %s7 = inlined_call_operand.vmem [shape: bf16[32,32], index: 7, kind: output, shape index: {0}]
  %s8 = inlined_call_operand.vmem [shape: bf16[32,32], index: 8, kind: output, shape index: {1}]
  %s9 = inlined_call_operand.vmem [shape: bf16[32,32], index: 9, kind: output, shape index: {2}]
  %10 = xla_tuple %s7, %s8, %s9
  %s11 = sld [smem:[#allocation0]]
  $region54: #{multihead_self_attention.2} parent=0
    _
  %s13 = ssub.s32 1, %s11
  %s14 = scalar_select 0, %s13, %s11
  // Predicated region
  $region2: #{multihead_self_attention.2} parent=0 // pred_check
    _
  $region3: #{multihead_self_attention.2} parent=0 // pred_check_branch
    %16 = sbr.rel (0) target = $region5
  $region4: #{multihead_self_attention.2} parent=0 // pred_region
    _
  $region5: #{multihead_self_attention.2} parent=0 // pred_fallthru
    _
  // Predicated region
  $region6: #{multihead_self_attention.2} parent=0 // pred_check
    _
  $region7: #{multihead_self_attention.2} parent=0 // pred_check_branch
    %18 = sbr.rel (0) target = $region9
  $region8: #{multihead_self_attention.2} parent=0 // pred_region
    _
  $region9: #{multihead_self_attention.2} parent=0 // pred_fallthru
    _
  // Predicated region
  $region10: #{multihead_self_attention.2} parent=0 // pred_check
    _
  $region11: #{multihead_self_attention.2} parent=0 // pred_check_branch
    %20 = sbr.rel (0) target = $region13
  $region12: #{multihead_self_attention.2} parent=0 // pred_region
    _
  $region13: #{multihead_self_attention.2} parent=0 // pred_fallthru
    _
  // Predicated region
  $region14: #{multihead_self_attention.2} parent=0 // pred_check
    _
  $region15: #{multihead_self_attention.2} parent=0 // pred_check_branch
    %22 = sbr.rel (0) target = $region17
  $region16: #{multihead_self_attention.2} parent=0 // pred_region
    _
  $region17: #{multihead_self_attention.2} parent=0 // pred_fallthru
    _
  // Predicated region
  $region18: #{multihead_self_attention.2} parent=0 // pred_check
    _
  $region19: #{multihead_self_attention.2} parent=0 // pred_check_branch
    %24 = sbr.rel (0) target = $region21
  $region20: #{multihead_self_attention.2} parent=0 // pred_region
    _
  $region21: #{multihead_self_attention.2} parent=0 // pred_fallthru
    _
  // Predicated region
  $region22: #{multihead_self_attention.2} parent=0 // pred_check
    _
  $region23: #{multihead_self_attention.2} parent=0 // pred_check_branch
    %26 = sbr.rel (0) target = $region25
  $region24: #{multihead_self_attention.2} parent=0 // pred_region
    _
  $region25: #{multihead_self_attention.2} parent=0 // pred_fallthru
    _
  // Predicated region
  $region26: #{multihead_self_attention.2} parent=0 // pred_check
    _
  $region27: #{multihead_self_attention.2} parent=0 // pred_check_branch
    %28 = sbr.rel (0) target = $region29
  $region28: #{multihead_self_attention.2} parent=0 // pred_region
    _
  $region29: #{multihead_self_attention.2} parent=0 // pred_fallthru
    _
  %v30 = vld [vmem:[%s0] sm:$0xf]
  %v31 = vld [vmem:[%s0 + $0x4] sm:$0xf]
  %v32 = vld [vmem:[%s0 + $0x8] sm:$0xf]
  %v33 = vld [vmem:[%s0 + $0xc] sm:$0xf]
  %v34 = vld [vmem:[%s1] sm:$0xf]
  %v35 = vld [vmem:[%s1 + $0x4] sm:$0xf]
  %v36 = vld [vmem:[%s1 + $0x8] sm:$0xf]
  %v37 = vld [vmem:[%s1 + $0xc] sm:$0xf]
  %v38 = vld [vmem:[%s4] sm:$0x1]
  %v40 = vlaneseq
  %v41 = vshrl.u32 %v40, 7
  %v42 = vsub.s32 0, %v41
  %v43 = vrot.slane %v38, %v42
  %v49 = vunpack.c.l.b16 %v30
  %v50 = vunpack.c.l.b16 %v31
  %v51 = vunpack.c.l.b16 %v32
  %v52 = vunpack.c.l.b16 %v33
  %v53 = vpack.c.b16 %v50, %v49
  %v54 = vpack.c.b16 %v52, %v51
  %v59 = vunpack.c.l.b16 %v34
  %v60 = vunpack.c.l.b16 %v35
  %v61 = vunpack.c.l.b16 %v36
  %v62 = vunpack.c.l.b16 %v37
  %v63 = vpack.c.b16 %v60, %v59
  %v64 = vpack.c.b16 %v62, %v61
  %vm67 = vcmask 261120
  %v69 = vsel %vm67, %v53, 0
  %v72 = vsel %vm67, %v54, 0
  %74 = vmatprep.subr.bf16.mxu0 0
  %75 = vmatpush1.bf16.msra.mxu0 %v63
  %76 = vmatprep.subr.bf16.mxu0 0
  %77 = vmatpush1.bf16.msra.mxu0 %v64
  %78 = vmatprep.subr.bf16.mxu0 0
  %79 = vmatpush1.bf16.msra.mxu0 0
  %80 = vmatprep.subr.bf16.mxu0 0
  %81 = vmatpush1.bf16.msra.mxu0 0
  %82 = vmatprep.subr.bf16.mxu0 0
  %83 = vmatpush1.bf16.msra.mxu0 0
  %84 = vmatprep.subr.bf16.mxu0 0
  %85 = vmatpush1.bf16.msra.mxu0 0
  %86 = vmatprep.subr.bf16.mxu0 0
  %87 = vmatpush1.bf16.msra.mxu0 0
  %88 = vmatprep.subr.bf16.mxu0 0
  %89 = vmatpush1.bf16.msra.mxu0 0
  %90 = vmatprep.subr.bf16.mxu0 0
  %91 = vmatpush1.bf16.msra.mxu0 0
  %92 = vmatprep.subr.bf16.mxu0 0
  %93 = vmatpush1.bf16.msra.mxu0 0
  %94 = vmatprep.subr.bf16.mxu0 0
  %95 = vmatpush1.bf16.msra.mxu0 0
  %96 = vmatprep.subr.bf16.mxu0 0
  %97 = vmatpush1.bf16.msra.mxu0 0
  %98 = vmatprep.subr.bf16.mxu0 0
  %99 = vmatpush1.bf16.msra.mxu0 0
  %100 = vmatprep.subr.bf16.mxu0 0
  %101 = vmatpush1.bf16.msra.mxu0 0
  %102 = vmatprep.subr.bf16.mxu0 0
  %103 = vmatpush1.bf16.msra.mxu0 0
  %104 = vmatprep.subr.bf16.mxu0 0
  %105 = vmatpush1.bf16.msra.mxu0 0
  %106 = vmatprep.mubr.bf16.mxu0 0
  %107 = vmatmul.mubr.bf16.gmra.mrb[0].mxu0 %v69
  %v108 = vpop.f32.mrb[0].mxu0
  %v109 = vadd.f32 %v43, %v108
  %v110 = vpop.f32.mrb[0].mxu0
  %v111 = vpop.f32.mrb[0].mxu0
  %v112 = vadd.f32 %v43, %v111
  %v113 = vpop.f32.mrb[0].mxu0
  %114 = vmatprep.mubr.bf16.mxu0 0
  %115 = vmatmul.mubr.bf16.gmra.mrb[0].mxu0 %v72
  %v116 = vpop.f32.mrb[0].mxu0
  %v117 = vadd.f32 %v43, %v116
  %v118 = vpop.f32.mrb[0].mxu0
  %v119 = vpop.f32.mrb[0].mxu0
  %v120 = vadd.f32 %v43, %v119
  %v121 = vpop.f32.mrb[0].mxu0
  %122 = vdwg.mxu0
  %v123 = vld [vmem:[%s2] sm:$0xf]
  %v124 = vld [vmem:[%s2 + $0x4] sm:$0xf]
  %v125 = vld [vmem:[%s2 + $0x8] sm:$0xf]
  %v126 = vld [vmem:[%s2 + $0xc] sm:$0xf]
  %v127 = vld [vmem:[%s5] sm:$0x1]
  %v129 = vlaneseq
  %v130 = vshrl.u32 %v129, 7
  %v131 = vsub.s32 0, %v130
  %v132 = vrot.slane %v127, %v131
  %v138 = vunpack.c.l.b16 %v123
  %v139 = vunpack.c.l.b16 %v124
  %v140 = vunpack.c.l.b16 %v125
  %v141 = vunpack.c.l.b16 %v126
  %v142 = vpack.c.b16 %v139, %v138
  %v143 = vpack.c.b16 %v141, %v140
  %146 = vmatprep.subr.bf16.mxu0 0
  %147 = vmatpush1.bf16.msra.mxu0 %v142
  %148 = vmatprep.subr.bf16.mxu0 0
  %149 = vmatpush1.bf16.msra.mxu0 %v143
  %150 = vmatprep.subr.bf16.mxu0 0
  %151 = vmatpush1.bf16.msra.mxu0 0
  %152 = vmatprep.subr.bf16.mxu0 0
  %153 = vmatpush1.bf16.msra.mxu0 0
  %154 = vmatprep.subr.bf16.mxu0 0
  %155 = vmatpush1.bf16.msra.mxu0 0
  %156 = vmatprep.subr.bf16.mxu0 0
  %157 = vmatpush1.bf16.msra.mxu0 0
  %158 = vmatprep.subr.bf16.mxu0 0
  %159 = vmatpush1.bf16.msra.mxu0 0
  %160 = vmatprep.subr.bf16.mxu0 0
  %161 = vmatpush1.bf16.msra.mxu0 0
  %162 = vmatprep.subr.bf16.mxu0 0
  %163 = vmatpush1.bf16.msra.mxu0 0
  %164 = vmatprep.subr.bf16.mxu0 0
  %165 = vmatpush1.bf16.msra.mxu0 0
  %166 = vmatprep.subr.bf16.mxu0 0
  %167 = vmatpush1.bf16.msra.mxu0 0
  %168 = vmatprep.subr.bf16.mxu0 0
  %169 = vmatpush1.bf16.msra.mxu0 0
  %170 = vmatprep.subr.bf16.mxu0 0
  %171 = vmatpush1.bf16.msra.mxu0 0
  %172 = vmatprep.subr.bf16.mxu0 0
  %173 = vmatpush1.bf16.msra.mxu0 0
  %174 = vmatprep.subr.bf16.mxu0 0
  %175 = vmatpush1.bf16.msra.mxu0 0
  %176 = vmatprep.subr.bf16.mxu0 0
  %177 = vmatpush1.bf16.msra.mxu0 0
  %178 = vmatprep.mubr.bf16.mxu0 0
  %179 = vmatmul.mubr.bf16.gmra.mrb[0].mxu0 %v69
  %v180 = vpop.f32.mrb[0].mxu0
  %v181 = vadd.f32 %v132, %v180
  %v182 = vpop.f32.mrb[0].mxu0
  %v183 = vpop.f32.mrb[0].mxu0
  %v184 = vadd.f32 %v132, %v183
  %v185 = vpop.f32.mrb[0].mxu0
  %186 = vmatprep.mubr.bf16.mxu0 0
  %187 = vmatmul.mubr.bf16.gmra.mrb[0].mxu0 %v72
  %v188 = vpop.f32.mrb[0].mxu0
  %v189 = vadd.f32 %v132, %v188
  %v190 = vpop.f32.mrb[0].mxu0
  %v191 = vpop.f32.mrb[0].mxu0
  %v192 = vadd.f32 %v132, %v191
  %v193 = vpop.f32.mrb[0].mxu0
  %194 = vdwg.mxu0
  %v195 = vld [vmem:[%s3] sm:$0xf]
  %v196 = vld [vmem:[%s3 + $0x4] sm:$0xf]
  %v197 = vld [vmem:[%s3 + $0x8] sm:$0xf]
  %v198 = vld [vmem:[%s3 + $0xc] sm:$0xf]
  %v199 = vld [vmem:[%s6] sm:$0x1]
  %v201 = vlaneseq
  %v202 = vshrl.u32 %v201, 7
  %v203 = vsub.s32 0, %v202
  %v204 = vrot.slane %v199, %v203
  %v210 = vunpack.c.l.b16 %v195
  %v211 = vunpack.c.l.b16 %v196
  %v212 = vunpack.c.l.b16 %v197
  %v213 = vunpack.c.l.b16 %v198
  %v214 = vpack.c.b16 %v211, %v210
  %v215 = vpack.c.b16 %v213, %v212
  %218 = vmatprep.subr.bf16.mxu0 0
  %219 = vmatpush1.bf16.msra.mxu0 %v214
  %220 = vmatprep.subr.bf16.mxu0 0
  %221 = vmatpush1.bf16.msra.mxu0 %v215
  %222 = vmatprep.subr.bf16.mxu0 0
  %223 = vmatpush1.bf16.msra.mxu0 0
  %224 = vmatprep.subr.bf16.mxu0 0
  %225 = vmatpush1.bf16.msra.mxu0 0
  %226 = vmatprep.subr.bf16.mxu0 0
  %227 = vmatpush1.bf16.msra.mxu0 0
  %228 = vmatprep.subr.bf16.mxu0 0
  %229 = vmatpush1.bf16.msra.mxu0 0
  %230 = vmatprep.subr.bf16.mxu0 0
  %231 = vmatpush1.bf16.msra.mxu0 0
  %232 = vmatprep.subr.bf16.mxu0 0
  %233 = vmatpush1.bf16.msra.mxu0 0
  %234 = vmatprep.subr.bf16.mxu0 0
  %235 = vmatpush1.bf16.msra.mxu0 0
  %236 = vmatprep.subr.bf16.mxu0 0
  %237 = vmatpush1.bf16.msra.mxu0 0
  %238 = vmatprep.subr.bf16.mxu0 0
  %239 = vmatpush1.bf16.msra.mxu0 0
  %240 = vmatprep.subr.bf16.mxu0 0
  %241 = vmatpush1.bf16.msra.mxu0 0
  %242 = vmatprep.subr.bf16.mxu0 0
  %243 = vmatpush1.bf16.msra.mxu0 0
  %244 = vmatprep.subr.bf16.mxu0 0
  %245 = vmatpush1.bf16.msra.mxu0 0
  %246 = vmatprep.subr.bf16.mxu0 0
  %247 = vmatpush1.bf16.msra.mxu0 0
  %248 = vmatprep.subr.bf16.mxu0 0
  %249 = vmatpush1.bf16.msra.mxu0 0
  %250 = vmatprep.mubr.bf16.mxu0 0
  %251 = vmatmul.mubr.bf16.gmra.mrb[0].mxu0 %v69
  %v252 = vpop.f32.mrb[0].mxu0
  %v253 = vadd.f32 %v204, %v252
  %v254 = vpop.f32.mrb[0].mxu0
  %v255 = vpop.f32.mrb[0].mxu0
  %v256 = vadd.f32 %v204, %v255
  %v257 = vpop.f32.mrb[0].mxu0
  %258 = vmatprep.mubr.bf16.mxu0 0
  %259 = vmatmul.mubr.bf16.gmra.mrb[0].mxu0 %v72
  %v260 = vpop.f32.mrb[0].mxu0
  %v261 = vadd.f32 %v204, %v260
  %v262 = vpop.f32.mrb[0].mxu0
  %v263 = vpop.f32.mrb[0].mxu0
  %v264 = vadd.f32 %v204, %v263
  %v265 = vpop.f32.mrb[0].mxu0
  %266 = vdwg.mxu0
  %v267 = vmul.f32 %v109, 0.35355338
  %v268 = vmul.f32 %v112, 0.35355338
  %v269 = vmul.f32 %v117, 0.35355338
  %v270 = vmul.f32 %v120, 0.35355338
  %v271 = vpack.c.bf16 %v268, %v267
  %v272 = vpack.c.bf16 %v270, %v269
  %v275 = vunpack.c.l.b16 %v271
  %v276 = vunpack.c.h.b16 %v271
  %v277 = vunpack.c.l.b16 %v272
  %v278 = vunpack.c.h.b16 %v272
  %v279 = vpack.c.b16 %v275, %v275
  %v280 = vpack.c.b16 %v276, %v276
  %v281 = vpack.c.b16 %v277, %v277
  %v282 = vpack.c.b16 %v278, %v278
  %vm287 = vcmask 257024
  %288 = vst.msk [vmem:[%s7] sm:$0xf] %vm287, %v279
  %289 = vst.msk [vmem:[%s7 + $0x4] sm:$0xf] %vm287, %v280
  %290 = vst.msk [vmem:[%s7 + $0x8] sm:$0xf] %vm287, %v281
  %291 = vst.msk [vmem:[%s7 + $0xc] sm:$0xf] %vm287, %v282
  %v292 = vpack.c.bf16 %v184, %v181
  %v293 = vpack.c.bf16 %v192, %v189
  %v296 = vunpack.c.l.b16 %v292
  %v297 = vunpack.c.h.b16 %v292
  %v298 = vunpack.c.l.b16 %v293
  %v299 = vunpack.c.h.b16 %v293
  %v300 = vpack.c.b16 %v296, %v296
  %v301 = vpack.c.b16 %v297, %v297
  %v302 = vpack.c.b16 %v298, %v298
  %v303 = vpack.c.b16 %v299, %v299
  %308 = vst.msk [vmem:[%s8] sm:$0xf] %vm287, %v300
  %309 = vst.msk [vmem:[%s8 + $0x4] sm:$0xf] %vm287, %v301
  %310 = vst.msk [vmem:[%s8 + $0x8] sm:$0xf] %vm287, %v302
  %311 = vst.msk [vmem:[%s8 + $0xc] sm:$0xf] %vm287, %v303
  %v312 = vpack.c.bf16 %v256, %v253
  %v313 = vpack.c.bf16 %v264, %v261
  %v316 = vunpack.c.l.b16 %v312
  %v317 = vunpack.c.h.b16 %v312
  %v318 = vunpack.c.l.b16 %v313
  %v319 = vunpack.c.h.b16 %v313
  %v320 = vpack.c.b16 %v316, %v316
  %v321 = vpack.c.b16 %v317, %v317
  %v322 = vpack.c.b16 %v318, %v318
  %v323 = vpack.c.b16 %v319, %v319
  %328 = vst.msk [vmem:[%s9] sm:$0xf] %vm287, %v320
  %329 = vst.msk [vmem:[%s9 + $0x4] sm:$0xf] %vm287, %v321
  %330 = vst.msk [vmem:[%s9 + $0x8] sm:$0xf] %vm287, %v322
  %331 = vst.msk [vmem:[%s9 + $0xc] sm:$0xf] %vm287, %v323
  // Predicated region
  $region30: #{multihead_self_attention.2} parent=0 // pred_check
    _
  $region31: #{multihead_self_attention.2} parent=0 // pred_check_branch
    %333 = sbr.rel (0) target = $region33
  $region32: #{multihead_self_attention.2} parent=0 // pred_region
    _
  $region33: #{multihead_self_attention.2} parent=0 // pred_fallthru
    _
  // Predicated region
  $region34: #{multihead_self_attention.2} parent=0 // pred_check
    _
  $region35: #{multihead_self_attention.2} parent=0 // pred_check_branch
    %335 = sbr.rel (0) target = $region37
  $region36: #{multihead_self_attention.2} parent=0 // pred_region
    _
  $region37: #{multihead_self_attention.2} parent=0 // pred_fallthru
    _
  // Predicated region
  $region38: #{multihead_self_attention.2} parent=0 // pred_check
    _
  $region39: #{multihead_self_attention.2} parent=0 // pred_check_branch
    %337 = sbr.rel (0) target = $region41
  $region40: #{multihead_self_attention.2} parent=0 // pred_region
    _
  $region41: #{multihead_self_attention.2} parent=0 // pred_fallthru
    _
  // Predicated region
  $region42: #{multihead_self_attention.2} parent=0 // pred_check
    _
  $region43: #{multihead_self_attention.2} parent=0 // pred_check_branch
    %339 = sbr.rel (0) target = $region45
  $region44: #{multihead_self_attention.2} parent=0 // pred_region
    _
  $region45: #{multihead_self_attention.2} parent=0 // pred_fallthru
    _
  // Predicated region
  $region46: #{multihead_self_attention.2} parent=0 // pred_check
    _
  $region47: #{multihead_self_attention.2} parent=0 // pred_check_branch
    %341 = sbr.rel (0) target = $region49
  $region48: #{multihead_self_attention.2} parent=0 // pred_region
    _
  $region49: #{multihead_self_attention.2} parent=0 // pred_fallthru
    _
  // Predicated region
  $region50: #{multihead_self_attention.2} parent=0 // pred_check
    _
  $region51: #{multihead_self_attention.2} parent=0 // pred_check_branch
    %343 = sbr.rel (0) target = $region53
  $region52: #{multihead_self_attention.2} parent=0 // pred_region
    _
  $region53: #{multihead_self_attention.2} parent=0 // pred_fallthru
    _

// kernel: multihead_self_attention.3
$region0: #{multihead_self_attention.3}
  #allocation0 [shape = 'u32[]', space=smem, size = 0x4, offset = 0x4, fixed_abs, tag = 'smem constant byte address 0x4 - core index']
  #allocation1 [shape = 'u32[144,128]{1,0:T(1,128)}', space=vmem, size = 0x12000, scoped, tag = 'internal scratch']
  #allocation2 [shape = 'f32[4,16,1]{2,1,0:T(8,128)}', space=vmem, size = 0x8000, scoped, tag = 'scratch operand']
  #allocation3 [shape = 'f32[4,16,1]{2,1,0:T(8,128)}', space=vmem, size = 0x8000, scoped, tag = 'scratch operand']
  #allocation4 [shape = 'f32[4,16,8]{2,1,0:T(8,128)}', space=vmem, size = 0x8000, scoped, tag = 'scratch operand']
  %s0 = inlined_call_operand.vmem [shape: bf16[2,4,16,8], index: 0, kind: input, shape index: {}]
  %s1 = inlined_call_operand.vmem [shape: bf16[2,4,16,8], index: 1, kind: input, shape index: {}]
  %s2 = inlined_call_operand.vmem [shape: bf16[2,4,16,8], index: 2, kind: input, shape index: {}]
  %s3 = inlined_call_operand.vmem [shape: bf16[32,32], index: 3, kind: input, shape index: {}]
  %s4 = inlined_call_operand.vmem [shape: f32[1,32], index: 4, kind: input, shape index: {}]
  %s5 = inlined_call_operand.hbm [shape: f32[2,16,32], index: 5, kind: output, shape index: {}]
  %s6 = sld [smem:[#allocation0]]
  $region61: #{multihead_self_attention.3} parent=0
    _
  %s8 = ssub.s32 1, %s6
  %s9 = scalar_select 0, %s8, %s6
  $region1: #{multihead_self_attention.3} parent=0
    #allocation5 [shape = 'u8[16384]{0}', space=vmem, size = 0x4000, scoped, tag = 'output window, operand 0']
    #allocation6 [shape = 's32[2]{0}', space=sflag, size = 0x8, scoped, tag = 'scoped memory for multihead_self_attention.3']
    %10 = vsyncpa [#allocation6], 0
    %s11 = scalar_lea.sflag [#allocation6], 1
    %12 = vsyncpa %s11, 0
    loop: start=0, step=1, limit=4
    $region2: #{multihead_self_attention.3} parent=1 // loop_pre_header
      _
    $region3: #{multihead_self_attention.3} parent=1 // loop_header
      %s14 = sphi 0, %s18
      %p15 = scmp.ge.s32.totalorder %s14, 4
      %s21 = sphi 0, %s40
      %s22 = sphi 0, %s36
      %s23 = sphi 0, %s32
      %s24 = sphi 0, %s21
      %s25 = sphi 0, %s22
      %s26 = sphi 0, %s23
      %s27 = sphi 0, %s24
      %s28 = sphi 0, %s25
      %s29 = sphi 0, %s26
      %s45 = sphi 0, %s47
      %s48 = sphi 0, %s45
      %s49 = sphi 0, %s48
      %s65 = sphi 0, %s49
      %s73 = sphi 0, %s75
      %s76 = sphi 0, %s73
      %s77 = sphi 0, %s76
      %s93 = sphi 0, %s77
      %s101 = sphi 0, %s103
      %s104 = sphi 0, %s101
      %s105 = sphi 0, %s104
      %s121 = sphi 0, %s105
      %s125 = sphi 0, %s125
      %s127 = sphi 0, %s125
      %s128 = sphi 0, %s127
      %s142 = sphi 0, %s128
      %s146 = sphi 0, %s146
      %s148 = sphi 0, %s146
      %s149 = sphi 0, %s148
      %s163 = sphi 0, %s149
      %s171 = sphi 0, %s173
      %s174 = sphi 0, %s171
      %s175 = sphi 0, %s174
      %s191 = sphi 0, %s175
    $region4: #{multihead_self_attention.3} parent=1 // loop_header_branch
      %17 = sbr.rel (%p15) target = $region8
    $region5: #{multihead_self_attention.3} parent=1 // loop_body
      %s19 = ssub.s32 %s14, 1
      %s20 = ssub.s32 %s14, 2
      %s30 = sadd.s32 1, %s23
      %p31 = scmp.ge.s32.totalorder %s30, 1
      %s32 = scalar_select %p31, 0, %s30
      %s33 = sadd.s32 1, %s22
      %s34 = scalar_select %p31, %s33, %s22
      %p35 = scmp.ge.s32.totalorder %s34, 1
      %s36 = scalar_select %p35, 0, %s34
      %s37 = sadd.s32 1, %s21
      %s38 = scalar_select %p35, %s37, %s21
      %p39 = scmp.ge.s32.totalorder %s38, 2
      %s40 = scalar_select %p39, 0, %s38
      %s41 = ssub.s32 %s21, %s40
      %s42 = ssub.s32 %s22, %s36
      %s43 = sor.u32 %s41, %s42
      %p44 = scmp.eq.s32.totalorder %s43, 0
      %s46 = sadd.s32 %s45, 1
      %s47 = scalar_select %p44, %s45, %s46
      %p50 = pneg %p44
      %p51 = scmp.eq.s32.totalorder %s14, 1
      %p52 = por %p50, %p51
      %p53 = scmp.ne.s32.totalorder %s45, %s48
      %p54 = scmp.eq.s32.totalorder %s14, 0
      %p55 = por %p53, %p54
      %p56 = scmp.ne.s32.totalorder %s45, %s48
      %p57 = scmp.eq.s32.totalorder %s19, 1
      %p58 = por %p56, %p57
      %p59 = scmp.ne.s32.totalorder %s48, %s49
      %p60 = scmp.eq.s32.totalorder %s19, 0
      %p61 = por %p59, %p60
      %p62 = scmp.ne.s32.totalorder %s48, %s49
      %p63 = scmp.eq.s32.totalorder %s20, 1
      %p64 = por %p62, %p63
      %p66 = scmp.ne.s32.totalorder %s49, %s65
      %p67 = scmp.eq.s32.totalorder %s20, 0
      %p68 = por %p66, %p67
      %s69 = ssub.s32 %s21, %s40
      %s70 = ssub.s32 %s23, %s32
      %s71 = sor.u32 %s69, %s70
      %p72 = scmp.eq.s32.totalorder %s71, 0
      %s74 = sadd.s32 %s73, 1
      %s75 = scalar_select %p72, %s73, %s74
      %p78 = pneg %p72
      %p79 = scmp.eq.s32.totalorder %s14, 1
      %p80 = por %p78, %p79
      %p81 = scmp.ne.s32.totalorder %s73, %s76
      %p82 = scmp.eq.s32.totalorder %s14, 0
      %p83 = por %p81, %p82
      %p84 = scmp.ne.s32.totalorder %s73, %s76
      %p85 = scmp.eq.s32.totalorder %s19, 1
      %p86 = por %p84, %p85
      %p87 = scmp.ne.s32.totalorder %s76, %s77
      %p88 = scmp.eq.s32.totalorder %s19, 0
      %p89 = por %p87, %p88
      %p90 = scmp.ne.s32.totalorder %s76, %s77
      %p91 = scmp.eq.s32.totalorder %s20, 1
      %p92 = por %p90, %p91
      %p94 = scmp.ne.s32.totalorder %s77, %s93
      %p95 = scmp.eq.s32.totalorder %s20, 0
      %p96 = por %p94, %p95
      %s97 = ssub.s32 %s21, %s40
      %s98 = ssub.s32 %s23, %s32
      %s99 = sor.u32 %s97, %s98
      %p100 = scmp.eq.s32.totalorder %s99, 0
      %s102 = sadd.s32 %s101, 1
      %s103 = scalar_select %p100, %s101, %s102
      %p106 = pneg %p100
      %p107 = scmp.eq.s32.totalorder %s14, 1
      %p108 = por %p106, %p107
      %p109 = scmp.ne.s32.totalorder %s101, %s104
      %p110 = scmp.eq.s32.totalorder %s14, 0
      %p111 = por %p109, %p110
      %p112 = scmp.ne.s32.totalorder %s101, %s104
      %p113 = scmp.eq.s32.totalorder %s19, 1
      %p114 = por %p112, %p113
      %p115 = scmp.ne.s32.totalorder %s104, %s105
      %p116 = scmp.eq.s32.totalorder %s19, 0
      %p117 = por %p115, %p116
      %p118 = scmp.ne.s32.totalorder %s104, %s105
      %p119 = scmp.eq.s32.totalorder %s20, 1
      %p120 = por %p118, %p119
      %p122 = scmp.ne.s32.totalorder %s105, %s121
      %p123 = scmp.eq.s32.totalorder %s20, 0
      %p124 = por %p122, %p123
      %s126 = sadd.s32 %s125, 1
      %p129 = scmp.eq.s32.totalorder %s14, 1
      %p130 = scmp.ne.s32.totalorder %s125, %s127
      %p131 = scmp.eq.s32.totalorder %s14, 0
      %p132 = por %p130, %p131
      %p133 = scmp.ne.s32.totalorder %s125, %s127
      %p134 = scmp.eq.s32.totalorder %s19, 1
      %p135 = por %p133, %p134
      %p136 = scmp.ne.s32.totalorder %s127, %s128
      %p137 = scmp.eq.s32.totalorder %s19, 0
      %p138 = por %p136, %p137
      %p139 = scmp.ne.s32.totalorder %s127, %s128
      %p140 = scmp.eq.s32.totalorder %s20, 1
      %p141 = por %p139, %p140
      %p143 = scmp.ne.s32.totalorder %s128, %s142
      %p144 = scmp.eq.s32.totalorder %s20, 0
      %p145 = por %p143, %p144
      %s147 = sadd.s32 %s146, 1
      %p150 = scmp.eq.s32.totalorder %s14, 1
      %p151 = scmp.ne.s32.totalorder %s146, %s148
      %p152 = scmp.eq.s32.totalorder %s14, 0
      %p153 = por %p151, %p152
      %p154 = scmp.ne.s32.totalorder %s146, %s148
      %p155 = scmp.eq.s32.totalorder %s19, 1
      %p156 = por %p154, %p155
      %p157 = scmp.ne.s32.totalorder %s148, %s149
      %p158 = scmp.eq.s32.totalorder %s19, 0
      %p159 = por %p157, %p158
      %p160 = scmp.ne.s32.totalorder %s148, %s149
      %p161 = scmp.eq.s32.totalorder %s20, 1
      %p162 = por %p160, %p161
      %p164 = scmp.ne.s32.totalorder %s149, %s163
      %p165 = scmp.eq.s32.totalorder %s20, 0
      %p166 = por %p164, %p165
      %s167 = ssub.s32 %s21, %s40
      %s168 = ssub.s32 %s22, %s36
      %s169 = sor.u32 %s167, %s168
      %p170 = scmp.eq.s32.totalorder %s169, 0
      %s172 = sadd.s32 %s171, 1
      %s173 = scalar_select %p170, %s171, %s172
      %p176 = pneg %p170
      %p177 = scmp.eq.s32.totalorder %s14, 1
      %p178 = por %p176, %p177
      %p179 = scmp.ne.s32.totalorder %s171, %s174
      %p180 = scmp.eq.s32.totalorder %s14, 0
      %p181 = por %p179, %p180
      %p182 = scmp.ne.s32.totalorder %s171, %s174
      %p183 = scmp.eq.s32.totalorder %s19, 1
      %p184 = por %p182, %p183
      %p185 = scmp.ne.s32.totalorder %s174, %s175
      %p186 = scmp.eq.s32.totalorder %s19, 0
      %p187 = por %p185, %p186
      %p188 = scmp.ne.s32.totalorder %s174, %s175
      %p189 = scmp.eq.s32.totalorder %s20, 1
      %p190 = por %p188, %p189
      %p192 = scmp.ne.s32.totalorder %s175, %s191
      %p193 = scmp.eq.s32.totalorder %s20, 0
      %p194 = por %p192, %p193
      %p195 = scmp.le.s32.totalorder 1, %s14
      %p196 = scmp.lt.s32.totalorder %s14, 3
      %p197 = pnand %p195, %p196
      %p198 = pneg %p197
      // Predicated region
      $region9: #{multihead_self_attention.3} parent=5 // pred_check
        _
      $region10: #{multihead_self_attention.3} parent=5 // pred_check_branch
        %200 = sbr.rel (%p197) target = $region12
      $region11: #{multihead_self_attention.3} parent=5 // pred_region
        %s201 = ssub.s32 %s14, 1
        // Predicated region
        $region13: #{multihead_self_attention.3} parent=11 // pred_check
          %p202 = pneg %p138
        $region14: #{multihead_self_attention.3} parent=11 // pred_check_branch
          %204 = sbr.rel (%p202) target = $region16
        $region15: #{multihead_self_attention.3} parent=11 // pred_region
          _
        $region16: #{multihead_self_attention.3} parent=11 // pred_fallthru
          _
        // Predicated region
        $region17: #{multihead_self_attention.3} parent=11 // pred_check
          %p205 = pneg %p159
        $region18: #{multihead_self_attention.3} parent=11 // pred_check_branch
          %207 = sbr.rel (%p205) target = $region20
        $region19: #{multihead_self_attention.3} parent=11 // pred_region
          _
        $region20: #{multihead_self_attention.3} parent=11 // pred_fallthru
          _
      $region12: #{multihead_self_attention.3} parent=5 // pred_fallthru
        _
      %p208 = scmp.lt.s32.totalorder %s14, 2
      // Predicated region
      $region21: #{multihead_self_attention.3} parent=5 // pred_check
        %p209 = pneg %p208
      $region22: #{multihead_self_attention.3} parent=5 // pred_check_branch
        %211 = sbr.rel (%p209) target = $region24
      $region23: #{multihead_self_attention.3} parent=5 // pred_region
        // Predicated region
        $region25: #{multihead_self_attention.3} parent=23 // pred_check
          %p212 = pneg %p55
        $region26: #{multihead_self_attention.3} parent=23 // pred_check_branch
          %214 = sbr.rel (%p212) target = $region28
        $region27: #{multihead_self_attention.3} parent=23 // pred_region
          %s215 = smul.u32 2, %s22
          %p216 = scmp.lt.s32.totalorder %s21, 1
          %s217 = scalar_select %p216, %s21, 1
          %p218 = scmp.lt.s32.totalorder %s215, 1
          %s219 = scalar_select %p218, %s215, 1
          %s220 = smul.addr %s217, 8
          %s221 = sadd.s32 %s219, %s220
          %s222 = smul.addr %s221, 4
          %s223 = scalar_lea.vmem %s0, %s222
          %s224 = smul.u32 2, %s22
        $region28: #{multihead_self_attention.3} parent=23 // pred_fallthru
          _
        // Predicated region
        $region29: #{multihead_self_attention.3} parent=23 // pred_check
          %p225 = pneg %p83
        $region30: #{multihead_self_attention.3} parent=23 // pred_check_branch
          %227 = sbr.rel (%p225) target = $region32
        $region31: #{multihead_self_attention.3} parent=23 // pred_region
          %s228 = smul.u32 2, %s23
          %p229 = scmp.lt.s32.totalorder %s21, 1
          %s230 = scalar_select %p229, %s21, 1
          %p231 = scmp.lt.s32.totalorder %s228, 1
          %s232 = scalar_select %p231, %s228, 1
          %s233 = smul.addr %s230, 8
          %s234 = sadd.s32 %s232, %s233
          %s235 = smul.addr %s234, 4
          %s236 = scalar_lea.vmem %s1, %s235
          %s237 = smul.u32 2, %s23
        $region32: #{multihead_self_attention.3} parent=23 // pred_fallthru
          _
        // Predicated region
        $region33: #{multihead_self_attention.3} parent=23 // pred_check
          %p238 = pneg %p111
        $region34: #{multihead_self_attention.3} parent=23 // pred_check_branch
          %240 = sbr.rel (%p238) target = $region36
        $region35: #{multihead_self_attention.3} parent=23 // pred_region
          %s241 = smul.u32 2, %s23
          %p242 = scmp.lt.s32.totalorder %s21, 1
          %s243 = scalar_select %p242, %s21, 1
          %p244 = scmp.lt.s32.totalorder %s241, 1
          %s245 = scalar_select %p244, %s241, 1
          %s246 = smul.addr %s243, 8
          %s247 = sadd.s32 %s245, %s246
          %s248 = smul.addr %s247, 4
          %s249 = scalar_lea.vmem %s2, %s248
          %s250 = smul.u32 2, %s23
        $region36: #{multihead_self_attention.3} parent=23 // pred_fallthru
          _
      $region24: #{multihead_self_attention.3} parent=5 // pred_fallthru
        _
      %p251 = scmp.le.s32.totalorder 1, %s14
      %p252 = scmp.lt.s32.totalorder %s14, 3
      %p253 = pnand %p251, %p252
      %p254 = pneg %p253
      // Predicated region
      $region37: #{multihead_self_attention.3} parent=5 // pred_check
        _
      $region38: #{multihead_self_attention.3} parent=5 // pred_check_branch
        %256 = sbr.rel (%p253) target = $region40
      $region39: #{multihead_self_attention.3} parent=5 // pred_region
        %s257 = ssub.s32 %s14, 1
        %s258 = smul.u32 2, %s25
        %p259 = scmp.lt.s32.totalorder %s24, 1
        %s260 = scalar_select %p259, %s24, 1
        %p261 = scmp.lt.s32.totalorder %s258, 1
        %s262 = scalar_select %p261, %s258, 1
        %s263 = smul.addr %s260, 8
        %s264 = sadd.s32 %s262, %s263
        %s265 = smul.addr %s264, 4
        %s266 = scalar_lea.vmem %s0, %s265
        %p267 = pneg %p61
        %p268 = pneg %p58
        %s269 = smul.u32 2, %s26
        %p270 = scmp.lt.s32.totalorder %s24, 1
        %s271 = scalar_select %p270, %s24, 1
        %p272 = scmp.lt.s32.totalorder %s269, 1
        %s273 = scalar_select %p272, %s269, 1
        %s274 = smul.addr %s271, 8
        %s275 = sadd.s32 %s273, %s274
        %s276 = smul.addr %s275, 4
        %s277 = scalar_lea.vmem %s1, %s276
        %p278 = pneg %p89
        %p279 = pneg %p86
        %s280 = smul.u32 2, %s26
        %p281 = scmp.lt.s32.totalorder %s24, 1
        %s282 = scalar_select %p281, %s24, 1
        %p283 = scmp.lt.s32.totalorder %s280, 1
        %s284 = scalar_select %p283, %s280, 1
        %s285 = smul.addr %s282, 8
        %s286 = sadd.s32 %s284, %s285
        %s287 = smul.addr %s286, 4
        %s288 = scalar_lea.vmem %s2, %s287
        %p289 = pneg %p117
        %p290 = pneg %p114
        %p291 = pneg %p138
        %p292 = pneg %p135
        %p293 = pneg %p159
        %p294 = pneg %p156
        %p295 = pneg %p187
        %p296 = pneg %p184
        %s297 = sand.u32 %s174, 1
        %s298 = scalar_lea.sflag [#allocation6], %s297
        %s299 = sand.u32 %s174, 1
        %s300 = smul.addr %s299, 16
        %s301 = scalar_lea.vmem [#allocation5], %s300
        %s302 = smul.u32 2, %s25
        %p303 = scmp.lt.s32.totalorder %s24, 1
        %s304 = scalar_select %p303, %s24, 1
        %p305 = scmp.lt.s32.totalorder %s302, 1
        %s306 = scalar_select %p305, %s302, 1
        %s307 = smul.addr %s304, 8
        %s308 = sadd.s32 %s306, %s307
        %s309 = smul.addr %s308, 4
        %s310 = scalar_lea.vmem %s0, %s309
        %s311 = smul.u32 2, %s25
        %s312 = smul.u32 2, %s26
        %p313 = scmp.lt.s32.totalorder %s24, 1
        %s314 = scalar_select %p313, %s24, 1
        %p315 = scmp.lt.s32.totalorder %s312, 1
        %s316 = scalar_select %p315, %s312, 1
        %s317 = smul.addr %s314, 8
        %s318 = sadd.s32 %s316, %s317
        %s319 = smul.addr %s318, 4
        %s320 = scalar_lea.vmem %s1, %s319
        %s321 = smul.u32 2, %s26
        %s322 = smul.u32 2, %s26
        %p323 = scmp.lt.s32.totalorder %s24, 1
        %s324 = scalar_select %p323, %s24, 1
        %p325 = scmp.lt.s32.totalorder %s322, 1
        %s326 = scalar_select %p325, %s322, 1
        %s327 = smul.addr %s324, 8
        %s328 = sadd.s32 %s326, %s327
        %s329 = smul.addr %s328, 4
        %s330 = scalar_lea.vmem %s2, %s329
        %s331 = smul.u32 2, %s26
        %s332 = smul.u32 2, %s25
        %p334 = scmp.eq.s32.totalorder %s26, 0
        // Predicated region
        $region41: #{multihead_self_attention.3} parent=39 // pred_check
          %p335 = pneg %p334
        $region42: #{multihead_self_attention.3} parent=39 // pred_check_branch
          %337 = sbr.rel (%p335) target = $region44
        $region43: #{multihead_self_attention.3} parent=39 // pred_region
          %vm338 = vcmask 7168
          %339 = vst.msk [vmem:[#allocation2] sm:$0xff] %vm338, -inf
          %340 = vst.msk [vmem:[#allocation2 + $0x8] sm:$0xff] %vm338, -inf
          %341 = vst.msk [vmem:[#allocation2 + $0x10] sm:$0xff] %vm338, -inf
          %342 = vst.msk [vmem:[#allocation2 + $0x18] sm:$0xff] %vm338, -inf
          %343 = vst.msk [vmem:[#allocation2 + $0x20] sm:$0xff] %vm338, -inf
          %344 = vst.msk [vmem:[#allocation2 + $0x28] sm:$0xff] %vm338, -inf
          %345 = vst.msk [vmem:[#allocation2 + $0x30] sm:$0xff] %vm338, -inf
          %346 = vst.msk [vmem:[#allocation2 + $0x38] sm:$0xff] %vm338, -inf
          %347 = vst.msk [vmem:[#allocation3] sm:$0xff] %vm338, 0.0
          %348 = vst.msk [vmem:[#allocation3 + $0x8] sm:$0xff] %vm338, 0.0
          %349 = vst.msk [vmem:[#allocation3 + $0x10] sm:$0xff] %vm338, 0.0
          %350 = vst.msk [vmem:[#allocation3 + $0x18] sm:$0xff] %vm338, 0.0
          %351 = vst.msk [vmem:[#allocation3 + $0x20] sm:$0xff] %vm338, 0.0
          %352 = vst.msk [vmem:[#allocation3 + $0x28] sm:$0xff] %vm338, 0.0
          %353 = vst.msk [vmem:[#allocation3 + $0x30] sm:$0xff] %vm338, 0.0
          %354 = vst.msk [vmem:[#allocation3 + $0x38] sm:$0xff] %vm338, 0.0
          %vm355 = vcmask 64512
          %356 = vst.msk [vmem:[#allocation4] sm:$0xff] %vm355, 0.0
          %357 = vst.msk [vmem:[#allocation4 + $0x8] sm:$0xff] %vm355, 0.0
          %358 = vst.msk [vmem:[#allocation4 + $0x10] sm:$0xff] %vm355, 0.0
          %359 = vst.msk [vmem:[#allocation4 + $0x18] sm:$0xff] %vm355, 0.0
          %360 = vst.msk [vmem:[#allocation4 + $0x20] sm:$0xff] %vm355, 0.0
          %361 = vst.msk [vmem:[#allocation4 + $0x28] sm:$0xff] %vm355, 0.0
          %362 = vst.msk [vmem:[#allocation4 + $0x30] sm:$0xff] %vm355, 0.0
          %363 = vst.msk [vmem:[#allocation4 + $0x38] sm:$0xff] %vm355, 0.0
        $region44: #{multihead_self_attention.3} parent=39 // pred_fallthru
          _
        %v364 = vld [vmem:[%s310] sm:$0xf]
        %v365 = vld [vmem:[%s310 + $0x4] sm:$0xf]
        %v366 = vld [vmem:[%s310 + $0x8] sm:$0xf]
        %v367 = vld [vmem:[%s310 + $0xc] sm:$0xf]
        %v368 = vld [vmem:[%s310 + $0x10] sm:$0xf]
        %v369 = vld [vmem:[%s310 + $0x14] sm:$0xf]
        %v370 = vld [vmem:[%s310 + $0x18] sm:$0xf]
        %v371 = vld [vmem:[%s310 + $0x1c] sm:$0xf]
        %v372 = vld [vmem:[%s320] sm:$0xf]
        %v373 = vld [vmem:[%s320 + $0x4] sm:$0xf]
        %v374 = vld [vmem:[%s320 + $0x8] sm:$0xf]
        %v375 = vld [vmem:[%s320 + $0xc] sm:$0xf]
        %v376 = vld [vmem:[%s320 + $0x10] sm:$0xf]
        %v377 = vld [vmem:[%s320 + $0x14] sm:$0xf]
        %v378 = vld [vmem:[%s320 + $0x18] sm:$0xf]
        %v379 = vld [vmem:[%s320 + $0x1c] sm:$0xf]
        %v380 = vld [vmem:[%s330] sm:$0xf]
        %v381 = vld [vmem:[%s330 + $0x4] sm:$0xf]
        %v382 = vld [vmem:[%s330 + $0x8] sm:$0xf]
        %v383 = vld [vmem:[%s330 + $0xc] sm:$0xf]
        %v384 = vld [vmem:[%s330 + $0x10] sm:$0xf]
        %v385 = vld [vmem:[%s330 + $0x14] sm:$0xf]
        %v386 = vld [vmem:[%s330 + $0x18] sm:$0xf]
        %v387 = vld [vmem:[%s330 + $0x1c] sm:$0xf]
        %v390 = vunpack.c.l.b16 %v364
        %v391 = vunpack.c.l.b16 %v365
        %v392 = vpack.c.b16 %v391, %v390
        %v395 = vunpack.c.l.b16 %v372
        %v396 = vunpack.c.l.b16 %v373
        %v397 = vpack.c.b16 %v396, %v395
        %vm398 = vcmask 64512
        %v400 = vsel %vm398, %v392, 0
        %v403 = vsel %vm398, %v397, 0
        %405 = vmatprep.subr.bf16.mxu0 0
        %406 = vmatpush1.bf16.xpose.msra.mxu0 %v403
        %407 = vmatprep.subr.bf16.mxu0 0
        %408 = vmatpush1.bf16.xpose.msra.mxu0 0
        %409 = vmatprep.subr.bf16.mxu0 0
        %410 = vmatpush1.bf16.xpose.msra.mxu0 0
        %411 = vmatprep.subr.bf16.mxu0 0
        %412 = vmatpush1.bf16.xpose.msra.mxu0 0
        %413 = vmatprep.subr.bf16.mxu0 0
        %414 = vmatpush1.bf16.xpose.msra.mxu0 0
        %415 = vmatprep.subr.bf16.mxu0 0
        %416 = vmatpush1.bf16.xpose.msra.mxu0 0
        %417 = vmatprep.subr.bf16.mxu0 0
        %418 = vmatpush1.bf16.xpose.msra.mxu0 0
        %419 = vmatprep.subr.bf16.mxu0 0
        %420 = vmatpush1.bf16.xpose.msra.mxu0 0
        %421 = vmatprep.subr.bf16.mxu0 0
        %422 = vmatpush1.bf16.xpose.msra.mxu0 0
        %423 = vmatprep.subr.bf16.mxu0 0
        %424 = vmatpush1.bf16.xpose.msra.mxu0 0
        %425 = vmatprep.subr.bf16.mxu0 0
        %426 = vmatpush1.bf16.xpose.msra.mxu0 0
        %427 = vmatprep.subr.bf16.mxu0 0
        %428 = vmatpush1.bf16.xpose.msra.mxu0 0
        %429 = vmatprep.subr.bf16.mxu0 0
        %430 = vmatpush1.bf16.xpose.msra.mxu0 0
        %431 = vmatprep.subr.bf16.mxu0 0
        %432 = vmatpush1.bf16.xpose.msra.mxu0 0
        %433 = vmatprep.subr.bf16.mxu0 0
        %434 = vmatpush1.bf16.xpose.msra.mxu0 0
        %435 = vmatprep.subr.bf16.mxu0 0
        %436 = vmatpush1.bf16.xpose.msra.mxu0 0
        %437 = vmatprep.mubr.bf16.mxu0 0
        %438 = vmatmul.mubr.bf16.gmra.mrb[0].mxu0 %v400
        %v439 = vpop.f32.mrb[0].mxu0
        %v440 = vadd.f32 0.0, %v439
        %v441 = vpop.f32.mrb[0].mxu0
        %v442 = vpop.f32.mrb[0].mxu0
        %v443 = vadd.f32 0.0, %v442
        %v444 = vpop.f32.mrb[0].mxu0
        %445 = vdwg.mxu0
        %v448 = vunpack.c.l.b16 %v366
        %v449 = vunpack.c.l.b16 %v367
        %v450 = vpack.c.b16 %v449, %v448
        %v453 = vunpack.c.l.b16 %v374
        %v454 = vunpack.c.l.b16 %v375
        %v455 = vpack.c.b16 %v454, %v453
        %v457 = vsel %vm398, %v450, 0
        %v460 = vsel %vm398, %v455, 0
        %462 = vmatprep.subr.bf16.mxu0 0
        %463 = vmatpush1.bf16.xpose.msra.mxu0 %v460
        %464 = vmatprep.subr.bf16.mxu0 0
        %465 = vmatpush1.bf16.xpose.msra.mxu0 0
        %466 = vmatprep.subr.bf16.mxu0 0
        %467 = vmatpush1.bf16.xpose.msra.mxu0 0
        %468 = vmatprep.subr.bf16.mxu0 0
        %469 = vmatpush1.bf16.xpose.msra.mxu0 0
        %470 = vmatprep.subr.bf16.mxu0 0
        %471 = vmatpush1.bf16.xpose.msra.mxu0 0
        %472 = vmatprep.subr.bf16.mxu0 0
        %473 = vmatpush1.bf16.xpose.msra.mxu0 0
        %474 = vmatprep.subr.bf16.mxu0 0
        %475 = vmatpush1.bf16.xpose.msra.mxu0 0
        %476 = vmatprep.subr.bf16.mxu0 0
        %477 = vmatpush1.bf16.xpose.msra.mxu0 0
        %478 = vmatprep.subr.bf16.mxu0 0
        %479 = vmatpush1.bf16.xpose.msra.mxu0 0
        %480 = vmatprep.subr.bf16.mxu0 0
        %481 = vmatpush1.bf16.xpose.msra.mxu0 0
        %482 = vmatprep.subr.bf16.mxu0 0
        %483 = vmatpush1.bf16.xpose.msra.mxu0 0
        %484 = vmatprep.subr.bf16.mxu0 0
        %485 = vmatpush1.bf16.xpose.msra.mxu0 0
        %486 = vmatprep.subr.bf16.mxu0 0
        %487 = vmatpush1.bf16.xpose.msra.mxu0 0
        %488 = vmatprep.subr.bf16.mxu0 0
        %489 = vmatpush1.bf16.xpose.msra.mxu0 0
        %490 = vmatprep.subr.bf16.mxu0 0
        %491 = vmatpush1.bf16.xpose.msra.mxu0 0
        %492 = vmatprep.subr.bf16.mxu0 0
        %493 = vmatpush1.bf16.xpose.msra.mxu0 0
        %494 = vmatprep.mubr.bf16.mxu0 0
        %495 = vmatmul.mubr.bf16.gmra.mrb[0].mxu0 %v457
        %v496 = vpop.f32.mrb[0].mxu0
        %v497 = vadd.f32 0.0, %v496
        %v498 = vpop.f32.mrb[0].mxu0
        %v499 = vpop.f32.mrb[0].mxu0
        %v500 = vadd.f32 0.0, %v499
        %v501 = vpop.f32.mrb[0].mxu0
        %502 = vdwg.mxu0
        %v505 = vunpack.c.l.b16 %v368
        %v506 = vunpack.c.l.b16 %v369
        %v507 = vpack.c.b16 %v506, %v505
        %v510 = vunpack.c.l.b16 %v376
        %v511 = vunpack.c.l.b16 %v377
        %v512 = vpack.c.b16 %v511, %v510
        %v514 = vsel %vm398, %v507, 0
        %v517 = vsel %vm398, %v512, 0
        %519 = vmatprep.subr.bf16.mxu0 0
        %520 = vmatpush1.bf16.xpose.msra.mxu0 %v517
        %521 = vmatprep.subr.bf16.mxu0 0
        %522 = vmatpush1.bf16.xpose.msra.mxu0 0
        %523 = vmatprep.subr.bf16.mxu0 0
        %524 = vmatpush1.bf16.xpose.msra.mxu0 0
        %525 = vmatprep.subr.bf16.mxu0 0
        %526 = vmatpush1.bf16.xpose.msra.mxu0 0
        %527 = vmatprep.subr.bf16.mxu0 0
        %528 = vmatpush1.bf16.xpose.msra.mxu0 0
        %529 = vmatprep.subr.bf16.mxu0 0
        %530 = vmatpush1.bf16.xpose.msra.mxu0 0
        %531 = vmatprep.subr.bf16.mxu0 0
        %532 = vmatpush1.bf16.xpose.msra.mxu0 0
        %533 = vmatprep.subr.bf16.mxu0 0
        %534 = vmatpush1.bf16.xpose.msra.mxu0 0
        %535 = vmatprep.subr.bf16.mxu0 0
        %536 = vmatpush1.bf16.xpose.msra.mxu0 0
        %537 = vmatprep.subr.bf16.mxu0 0
        %538 = vmatpush1.bf16.xpose.msra.mxu0 0
        %539 = vmatprep.subr.bf16.mxu0 0
        %540 = vmatpush1.bf16.xpose.msra.mxu0 0
        %541 = vmatprep.subr.bf16.mxu0 0
        %542 = vmatpush1.bf16.xpose.msra.mxu0 0
        %543 = vmatprep.subr.bf16.mxu0 0
        %544 = vmatpush1.bf16.xpose.msra.mxu0 0
        %545 = vmatprep.subr.bf16.mxu0 0
        %546 = vmatpush1.bf16.xpose.msra.mxu0 0
        %547 = vmatprep.subr.bf16.mxu0 0
        %548 = vmatpush1.bf16.xpose.msra.mxu0 0
        %549 = vmatprep.subr.bf16.mxu0 0
        %550 = vmatpush1.bf16.xpose.msra.mxu0 0
        %551 = vmatprep.mubr.bf16.mxu0 0
        %552 = vmatmul.mubr.bf16.gmra.mrb[0].mxu0 %v514
        %v553 = vpop.f32.mrb[0].mxu0
        %v554 = vadd.f32 0.0, %v553
        %v555 = vpop.f32.mrb[0].mxu0
        %v556 = vpop.f32.mrb[0].mxu0
        %v557 = vadd.f32 0.0, %v556
        %v558 = vpop.f32.mrb[0].mxu0
        %559 = vdwg.mxu0
        %v562 = vunpack.c.l.b16 %v370
        %v563 = vunpack.c.l.b16 %v371
        %v564 = vpack.c.b16 %v563, %v562
        %v567 = vunpack.c.l.b16 %v378
        %v568 = vunpack.c.l.b16 %v379
        %v569 = vpack.c.b16 %v568, %v567
        %v571 = vsel %vm398, %v564, 0
        %v574 = vsel %vm398, %v569, 0
        %576 = vmatprep.subr.bf16.mxu0 0
        %577 = vmatpush1.bf16.xpose.msra.mxu0 %v574
        %578 = vmatprep.subr.bf16.mxu0 0
        %579 = vmatpush1.bf16.xpose.msra.mxu0 0
        %580 = vmatprep.subr.bf16.mxu0 0
        %581 = vmatpush1.bf16.xpose.msra.mxu0 0
        %582 = vmatprep.subr.bf16.mxu0 0
        %583 = vmatpush1.bf16.xpose.msra.mxu0 0
        %584 = vmatprep.subr.bf16.mxu0 0
        %585 = vmatpush1.bf16.xpose.msra.mxu0 0
        %586 = vmatprep.subr.bf16.mxu0 0
        %587 = vmatpush1.bf16.xpose.msra.mxu0 0
        %588 = vmatprep.subr.bf16.mxu0 0
        %589 = vmatpush1.bf16.xpose.msra.mxu0 0
        %590 = vmatprep.subr.bf16.mxu0 0
        %591 = vmatpush1.bf16.xpose.msra.mxu0 0
        %592 = vmatprep.subr.bf16.mxu0 0
        %593 = vmatpush1.bf16.xpose.msra.mxu0 0
        %594 = vmatprep.subr.bf16.mxu0 0
        %595 = vmatpush1.bf16.xpose.msra.mxu0 0
        %596 = vmatprep.subr.bf16.mxu0 0
        %597 = vmatpush1.bf16.xpose.msra.mxu0 0
        %598 = vmatprep.subr.bf16.mxu0 0
        %599 = vmatpush1.bf16.xpose.msra.mxu0 0
        %600 = vmatprep.subr.bf16.mxu0 0
        %601 = vmatpush1.bf16.xpose.msra.mxu0 0
        %602 = vmatprep.subr.bf16.mxu0 0
        %603 = vmatpush1.bf16.xpose.msra.mxu0 0
        %604 = vmatprep.subr.bf16.mxu0 0
        %605 = vmatpush1.bf16.xpose.msra.mxu0 0
        %606 = vmatprep.subr.bf16.mxu0 0
        %607 = vmatpush1.bf16.xpose.msra.mxu0 0
        %608 = vmatprep.mubr.bf16.mxu0 0
        %609 = vmatmul.mubr.bf16.gmra.mrb[0].mxu0 %v571
        %v610 = vpop.f32.mrb[0].mxu0
        %v611 = vadd.f32 0.0, %v610
        %v612 = vpop.f32.mrb[0].mxu0
        %v613 = vpop.f32.mrb[0].mxu0
        %v614 = vadd.f32 0.0, %v613
        %v615 = vpop.f32.mrb[0].mxu0
        %616 = vdwg.mxu0
        %v617 = vld [vmem:[#allocation2] sm:$0xff]
        %v618 = vld [vmem:[#allocation2 + $0x8] sm:$0xff]
        %v619 = vld [vmem:[#allocation2 + $0x10] sm:$0xff]
        %v620 = vld [vmem:[#allocation2 + $0x18] sm:$0xff]
        %v621 = vld [vmem:[#allocation2 + $0x20] sm:$0xff]
        %v622 = vld [vmem:[#allocation2 + $0x28] sm:$0xff]
        %v623 = vld [vmem:[#allocation2 + $0x30] sm:$0xff]
        %v624 = vld [vmem:[#allocation2 + $0x38] sm:$0xff]
        %vm625 = vcmask 130048
        %v626 = vsel %vm625, %v440, -inf
        %627 = vmax.xlane.f32.xlu0 %v626
        %v628 = vpop.xlane.xlu0 %627
        %v629 = vsel %vm625, %v443, -inf
        %630 = vmax.xlane.f32.xlu0 %v629
        %v631 = vpop.xlane.xlu0 %630
        %v632 = vsel %vm625, %v497, -inf
        %633 = vmax.xlane.f32.xlu0 %v632
        %v634 = vpop.xlane.xlu0 %633
        %v635 = vsel %vm625, %v500, -inf
        %636 = vmax.xlane.f32.xlu0 %v635
        %v637 = vpop.xlane.xlu0 %636
        %v638 = vsel %vm625, %v554, -inf
        %639 = vmax.xlane.f32.xlu0 %v638
        %v640 = vpop.xlane.xlu0 %639
        %v641 = vsel %vm625, %v557, -inf
        %642 = vmax.xlane.f32.xlu0 %v641
        %v643 = vpop.xlane.xlu0 %642
        %v644 = vsel %vm625, %v611, -inf
        %645 = vmax.xlane.f32.xlu0 %v644
        %v646 = vpop.xlane.xlu0 %645
        %v647 = vsel %vm625, %v614, -inf
        %648 = vmax.xlane.f32.xlu0 %v647
        %v649 = vpop.xlane.xlu0 %648
        %v650 = vmax.f32 %v617, %v628
        %v651 = vmax.f32 %v618, %v631
        %v652 = vmax.f32 %v619, %v634
        %v653 = vmax.f32 %v620, %v637
        %v654 = vmax.f32 %v621, %v640
        %v655 = vmax.f32 %v622, %v643
        %v656 = vmax.f32 %v623, %v646
        %v657 = vmax.f32 %v624, %v649
        %v658 = vsub.f32 %v617, %v650
        %v659 = vsub.f32 %v618, %v651
        %v660 = vsub.f32 %v619, %v652
        %v661 = vsub.f32 %v620, %v653
        %v662 = vsub.f32 %v621, %v654
        %v663 = vsub.f32 %v622, %v655
        %v664 = vsub.f32 %v623, %v656
        %v665 = vsub.f32 %v624, %v657
        %v666 = vmul.f32 %v658, 1.442695
        %v667 = vpow.pop %v666
        %v668 = vmul.f32 %v659, 1.442695
        %v669 = vpow.pop %v668
        %v670 = vmul.f32 %v660, 1.442695
        %v671 = vpow.pop %v670
        %v672 = vmul.f32 %v661, 1.442695
        %v673 = vpow.pop %v672
        %v674 = vmul.f32 %v662, 1.442695
        %v675 = vpow.pop %v674
        %v676 = vmul.f32 %v663, 1.442695
        %v677 = vpow.pop %v676
        %v678 = vmul.f32 %v664, 1.442695
        %v679 = vpow.pop %v678
        %v680 = vmul.f32 %v665, 1.442695
        %v681 = vpow.pop %v680
        %683 = vset.pattern.permute.xlu0 0
        %684 = vperm.xlu0 %683, %v650
        %v685 = vpop.permute.xlu0 %684
        %688 = vset.pattern.permute.xlu0 0
        %689 = vperm.xlu0 %688, %v651
        %v690 = vpop.permute.xlu0 %689
        %693 = vset.pattern.permute.xlu0 0
        %694 = vperm.xlu0 %693, %v652
        %v695 = vpop.permute.xlu0 %694
        %698 = vset.pattern.permute.xlu0 0
        %699 = vperm.xlu0 %698, %v653
        %v700 = vpop.permute.xlu0 %699
        %703 = vset.pattern.permute.xlu0 0
        %704 = vperm.xlu0 %703, %v654
        %v705 = vpop.permute.xlu0 %704
        %708 = vset.pattern.permute.xlu0 0
        %709 = vperm.xlu0 %708, %v655
        %v710 = vpop.permute.xlu0 %709
        %713 = vset.pattern.permute.xlu0 0
        %714 = vperm.xlu0 %713, %v656
        %v715 = vpop.permute.xlu0 %714
        %718 = vset.pattern.permute.xlu0 0
        %719 = vperm.xlu0 %718, %v657
        %v720 = vpop.permute.xlu0 %719
        %v722 = vsub.f32 %v440, %v685
        %v723 = vsub.f32 %v443, %v690
        %v724 = vsub.f32 %v497, %v695
        %v725 = vsub.f32 %v500, %v700
        %v726 = vsub.f32 %v554, %v705
        %v727 = vsub.f32 %v557, %v710
        %v728 = vsub.f32 %v611, %v715
        %v729 = vsub.f32 %v614, %v720
        %v730 = vmul.f32 %v722, 1.442695
        %v731 = vpow.pop %v730
        %v732 = vmul.f32 %v723, 1.442695
        %v733 = vpow.pop %v732
        %v734 = vmul.f32 %v724, 1.442695
        %v735 = vpow.pop %v734
        %v736 = vmul.f32 %v725, 1.442695
        %v737 = vpow.pop %v736
        %v738 = vmul.f32 %v726, 1.442695
        %v739 = vpow.pop %v738
        %v740 = vmul.f32 %v727, 1.442695
        %v741 = vpow.pop %v740
        %v742 = vmul.f32 %v728, 1.442695
        %v743 = vpow.pop %v742
        %v744 = vmul.f32 %v729, 1.442695
        %v745 = vpow.pop %v744
        %v746 = vld [vmem:[#allocation3] sm:$0xff]
        %v747 = vld [vmem:[#allocation3 + $0x8] sm:$0xff]
        %v748 = vld [vmem:[#allocation3 + $0x10] sm:$0xff]
        %v749 = vld [vmem:[#allocation3 + $0x18] sm:$0xff]
        %v750 = vld [vmem:[#allocation3 + $0x20] sm:$0xff]
        %v751 = vld [vmem:[#allocation3 + $0x28] sm:$0xff]
        %v752 = vld [vmem:[#allocation3 + $0x30] sm:$0xff]
        %v753 = vld [vmem:[#allocation3 + $0x38] sm:$0xff]
        %v754 = vmul.f32 %v667, %v746
        %v755 = vmul.f32 %v669, %v747
        %v756 = vmul.f32 %v671, %v748
        %v757 = vmul.f32 %v673, %v749
        %v758 = vmul.f32 %v675, %v750
        %v759 = vmul.f32 %v677, %v751
        %v760 = vmul.f32 %v679, %v752
        %v761 = vmul.f32 %v681, %v753
        %v762 = vsel %vm625, %v731, 0.0
        %763 = vadd.xlane.f32.xlu0 %v762
        %v764 = vpop.xlane.xlu0 %763
        %v765 = vsel %vm625, %v733, 0.0
        %766 = vadd.xlane.f32.xlu0 %v765
        %v767 = vpop.xlane.xlu0 %766
        %v768 = vsel %vm625, %v735, 0.0
        %769 = vadd.xlane.f32.xlu0 %v768
        %v770 = vpop.xlane.xlu0 %769
        %v771 = vsel %vm625, %v737, 0.0
        %772 = vadd.xlane.f32.xlu0 %v771
        %v773 = vpop.xlane.xlu0 %772
        %v774 = vsel %vm625, %v739, 0.0
        %775 = vadd.xlane.f32.xlu0 %v774
        %v776 = vpop.xlane.xlu0 %775
        %v777 = vsel %vm625, %v741, 0.0
        %778 = vadd.xlane.f32.xlu0 %v777
        %v779 = vpop.xlane.xlu0 %778
        %v780 = vsel %vm625, %v743, 0.0
        %781 = vadd.xlane.f32.xlu0 %v780
        %v782 = vpop.xlane.xlu0 %781
        %v783 = vsel %vm625, %v745, 0.0
        %784 = vadd.xlane.f32.xlu0 %v783
        %v785 = vpop.xlane.xlu0 %784
        %v786 = vadd.f32 %v754, %v764
        %v787 = vadd.f32 %v755, %v767
        %v788 = vadd.f32 %v756, %v770
        %v789 = vadd.f32 %v757, %v773
        %v790 = vadd.f32 %v758, %v776
        %v791 = vadd.f32 %v759, %v779
        %v792 = vadd.f32 %v760, %v782
        %v793 = vadd.f32 %v761, %v785
        %vm794 = vcmask 7168
        %795 = vst.msk [vmem:[#allocation3] sm:$0xff] %vm794, %v786
        %796 = vst.msk [vmem:[#allocation3 + $0x8] sm:$0xff] %vm794, %v787
        %797 = vst.msk [vmem:[#allocation3 + $0x10] sm:$0xff] %vm794, %v788
        %798 = vst.msk [vmem:[#allocation3 + $0x18] sm:$0xff] %vm794, %v789
        %799 = vst.msk [vmem:[#allocation3 + $0x20] sm:$0xff] %vm794, %v790
        %800 = vst.msk [vmem:[#allocation3 + $0x28] sm:$0xff] %vm794, %v791
        %801 = vst.msk [vmem:[#allocation3 + $0x30] sm:$0xff] %vm794, %v792
        %802 = vst.msk [vmem:[#allocation3 + $0x38] sm:$0xff] %vm794, %v793
        %v803 = vld [vmem:[#allocation4] sm:$0xff]
        %v804 = vld [vmem:[#allocation4 + $0x8] sm:$0xff]
        %v805 = vld [vmem:[#allocation4 + $0x10] sm:$0xff]
        %v806 = vld [vmem:[#allocation4 + $0x18] sm:$0xff]
        %v807 = vld [vmem:[#allocation4 + $0x20] sm:$0xff]
        %v808 = vld [vmem:[#allocation4 + $0x28] sm:$0xff]
        %v809 = vld [vmem:[#allocation4 + $0x30] sm:$0xff]
        %v810 = vld [vmem:[#allocation4 + $0x38] sm:$0xff]
        %812 = vset.pattern.permute.xlu0 0
        %813 = vperm.xlu0 %812, %v667
        %v814 = vpop.permute.xlu0 %813
        %817 = vset.pattern.permute.xlu0 0
        %818 = vperm.xlu0 %817, %v669
        %v819 = vpop.permute.xlu0 %818
        %822 = vset.pattern.permute.xlu0 0
        %823 = vperm.xlu0 %822, %v671
        %v824 = vpop.permute.xlu0 %823
        %827 = vset.pattern.permute.xlu0 0
        %828 = vperm.xlu0 %827, %v673
        %v829 = vpop.permute.xlu0 %828
        %832 = vset.pattern.permute.xlu0 0
        %833 = vperm.xlu0 %832, %v675
        %v834 = vpop.permute.xlu0 %833
        %837 = vset.pattern.permute.xlu0 0
        %838 = vperm.xlu0 %837, %v677
        %v839 = vpop.permute.xlu0 %838
        %842 = vset.pattern.permute.xlu0 0
        %843 = vperm.xlu0 %842, %v679
        %v844 = vpop.permute.xlu0 %843
        %847 = vset.pattern.permute.xlu0 0
        %848 = vperm.xlu0 %847, %v681
        %v849 = vpop.permute.xlu0 %848
        %v851 = vmul.f32 %v814, %v803
        %v852 = vmul.f32 %v819, %v804
        %v853 = vmul.f32 %v824, %v805
        %v854 = vmul.f32 %v829, %v806
        %v855 = vmul.f32 %v834, %v807
        %v856 = vmul.f32 %v839, %v808
        %v857 = vmul.f32 %v844, %v809
        %v858 = vmul.f32 %v849, %v810
        %v859 = vpack.c.bf16 %v733, %v731
        %v860 = vpack.c.bf16 %v737, %v735
        %v861 = vpack.c.bf16 %v741, %v739
        %v862 = vpack.c.bf16 %v745, %v743
        %v865 = vunpack.c.l.b16 %v380
        %v866 = vunpack.c.l.b16 %v381
        %v867 = vpack.c.b16 %v866, %v865
        %v870 = vsel %vm625, %v859, 0
        %872 = vmatprep.subr.bf16.mxu0 0
        %873 = vmatpush1.bf16.msra.mxu0 %v867
        %874 = vmatprep.subr.bf16.mxu0 0
        %875 = vmatpush1.bf16.msra.mxu0 0
        %876 = vmatprep.subr.bf16.mxu0 0
        %877 = vmatpush1.bf16.msra.mxu0 0
        %878 = vmatprep.subr.bf16.mxu0 0
        %879 = vmatpush1.bf16.msra.mxu0 0
        %880 = vmatprep.subr.bf16.mxu0 0
        %881 = vmatpush1.bf16.msra.mxu0 0
        %882 = vmatprep.subr.bf16.mxu0 0
        %883 = vmatpush1.bf16.msra.mxu0 0
        %884 = vmatprep.subr.bf16.mxu0 0
        %885 = vmatpush1.bf16.msra.mxu0 0
        %886 = vmatprep.subr.bf16.mxu0 0
        %887 = vmatpush1.bf16.msra.mxu0 0
        %888 = vmatprep.subr.bf16.mxu0 0
        %889 = vmatpush1.bf16.msra.mxu0 0
        %890 = vmatprep.subr.bf16.mxu0 0
        %891 = vmatpush1.bf16.msra.mxu0 0
        %892 = vmatprep.subr.bf16.mxu0 0
        %893 = vmatpush1.bf16.msra.mxu0 0
        %894 = vmatprep.subr.bf16.mxu0 0
        %895 = vmatpush1.bf16.msra.mxu0 0
        %896 = vmatprep.subr.bf16.mxu0 0
        %897 = vmatpush1.bf16.msra.mxu0 0
        %898 = vmatprep.subr.bf16.mxu0 0
        %899 = vmatpush1.bf16.msra.mxu0 0
        %900 = vmatprep.subr.bf16.mxu0 0
        %901 = vmatpush1.bf16.msra.mxu0 0
        %902 = vmatprep.subr.bf16.mxu0 0
        %903 = vmatpush1.bf16.msra.mxu0 0
        %904 = vmatprep.mubr.bf16.mxu0 0
        %905 = vmatmul.mubr.bf16.gmra.mrb[0].mxu0 %v870
        %v906 = vpop.f32.mrb[0].mxu0
        %v907 = vadd.f32 0.0, %v906
        %v908 = vpop.f32.mrb[0].mxu0
        %v909 = vpop.f32.mrb[0].mxu0
        %v910 = vadd.f32 0.0, %v909
        %v911 = vpop.f32.mrb[0].mxu0
        %912 = vdwg.mxu0
        %v915 = vunpack.c.l.b16 %v382
        %v916 = vunpack.c.l.b16 %v383
        %v917 = vpack.c.b16 %v916, %v915
        %v920 = vsel %vm625, %v860, 0
        %922 = vmatprep.subr.bf16.mxu0 0
        %923 = vmatpush1.bf16.msra.mxu0 %v917
        %924 = vmatprep.subr.bf16.mxu0 0
        %925 = vmatpush1.bf16.msra.mxu0 0
        %926 = vmatprep.subr.bf16.mxu0 0
        %927 = vmatpush1.bf16.msra.mxu0 0
        %928 = vmatprep.subr.bf16.mxu0 0
        %929 = vmatpush1.bf16.msra.mxu0 0
        %930 = vmatprep.subr.bf16.mxu0 0
        %931 = vmatpush1.bf16.msra.mxu0 0
        %932 = vmatprep.subr.bf16.mxu0 0
        %933 = vmatpush1.bf16.msra.mxu0 0
        %934 = vmatprep.subr.bf16.mxu0 0
        %935 = vmatpush1.bf16.msra.mxu0 0
        %936 = vmatprep.subr.bf16.mxu0 0
        %937 = vmatpush1.bf16.msra.mxu0 0
        %938 = vmatprep.subr.bf16.mxu0 0
        %939 = vmatpush1.bf16.msra.mxu0 0
        %940 = vmatprep.subr.bf16.mxu0 0
        %941 = vmatpush1.bf16.msra.mxu0 0
        %942 = vmatprep.subr.bf16.mxu0 0
        %943 = vmatpush1.bf16.msra.mxu0 0
        %944 = vmatprep.subr.bf16.mxu0 0
        %945 = vmatpush1.bf16.msra.mxu0 0
        %946 = vmatprep.subr.bf16.mxu0 0
        %947 = vmatpush1.bf16.msra.mxu0 0
        %948 = vmatprep.subr.bf16.mxu0 0
        %949 = vmatpush1.bf16.msra.mxu0 0
        %950 = vmatprep.subr.bf16.mxu0 0
        %951 = vmatpush1.bf16.msra.mxu0 0
        %952 = vmatprep.subr.bf16.mxu0 0
        %953 = vmatpush1.bf16.msra.mxu0 0
        %954 = vmatprep.mubr.bf16.mxu0 0
        %955 = vmatmul.mubr.bf16.gmra.mrb[0].mxu0 %v920
        %v956 = vpop.f32.mrb[0].mxu0
        %v957 = vadd.f32 0.0, %v956
        %v958 = vpop.f32.mrb[0].mxu0
        %v959 = vpop.f32.mrb[0].mxu0
        %v960 = vadd.f32 0.0, %v959
        %v961 = vpop.f32.mrb[0].mxu0
        %962 = vdwg.mxu0
        %v965 = vunpack.c.l.b16 %v384
        %v966 = vunpack.c.l.b16 %v385
        %v967 = vpack.c.b16 %v966, %v965
        %v970 = vsel %vm625, %v861, 0
        %972 = vmatprep.subr.bf16.mxu0 0
        %973 = vmatpush1.bf16.msra.mxu0 %v967
        %974 = vmatprep.subr.bf16.mxu0 0
        %975 = vmatpush1.bf16.msra.mxu0 0
        %976 = vmatprep.subr.bf16.mxu0 0
        %977 = vmatpush1.bf16.msra.mxu0 0
        %978 = vmatprep.subr.bf16.mxu0 0
        %979 = vmatpush1.bf16.msra.mxu0 0
        %980 = vmatprep.subr.bf16.mxu0 0
        %981 = vmatpush1.bf16.msra.mxu0 0
        %982 = vmatprep.subr.bf16.mxu0 0
        %983 = vmatpush1.bf16.msra.mxu0 0
        %984 = vmatprep.subr.bf16.mxu0 0
        %985 = vmatpush1.bf16.msra.mxu0 0
        %986 = vmatprep.subr.bf16.mxu0 0
        %987 = vmatpush1.bf16.msra.mxu0 0
        %988 = vmatprep.subr.bf16.mxu0 0
        %989 = vmatpush1.bf16.msra.mxu0 0
        %990 = vmatprep.subr.bf16.mxu0 0
        %991 = vmatpush1.bf16.msra.mxu0 0
        %992 = vmatprep.subr.bf16.mxu0 0
        %993 = vmatpush1.bf16.msra.mxu0 0
        %994 = vmatprep.subr.bf16.mxu0 0
        %995 = vmatpush1.bf16.msra.mxu0 0
        %996 = vmatprep.subr.bf16.mxu0 0
        %997 = vmatpush1.bf16.msra.mxu0 0
        %998 = vmatprep.subr.bf16.mxu0 0
        %999 = vmatpush1.bf16.msra.mxu0 0
        %1000 = vmatprep.subr.bf16.mxu0 0
        %1001 = vmatpush1.bf16.msra.mxu0 0
        %1002 = vmatprep.subr.bf16.mxu0 0
        %1003 = vmatpush1.bf16.msra.mxu0 0
        %1004 = vmatprep.mubr.bf16.mxu0 0
        %1005 = vmatmul.mubr.bf16.gmra.mrb[0].mxu0 %v970
        %v1006 = vpop.f32.mrb[0].mxu0
        %v1007 = vadd.f32 0.0, %v1006
        %v1008 = vpop.f32.mrb[0].mxu0
        %v1009 = vpop.f32.mrb[0].mxu0
        %v1010 = vadd.f32 0.0, %v1009
        %v1011 = vpop.f32.mrb[0].mxu0
        %1012 = vdwg.mxu0
        %v1015 = vunpack.c.l.b16 %v386
        %v1016 = vunpack.c.l.b16 %v387
        %v1017 = vpack.c.b16 %v1016, %v1015
        %v1020 = vsel %vm625, %v862, 0
        %1022 = vmatprep.subr.bf16.mxu0 0
        %1023 = vmatpush1.bf16.msra.mxu0 %v1017
        %1024 = vmatprep.subr.bf16.mxu0 0
        %1025 = vmatpush1.bf16.msra.mxu0 0
        %1026 = vmatprep.subr.bf16.mxu0 0
        %1027 = vmatpush1.bf16.msra.mxu0 0
        %1028 = vmatprep.subr.bf16.mxu0 0
        %1029 = vmatpush1.bf16.msra.mxu0 0
        %1030 = vmatprep.subr.bf16.mxu0 0
        %1031 = vmatpush1.bf16.msra.mxu0 0
        %1032 = vmatprep.subr.bf16.mxu0 0
        %1033 = vmatpush1.bf16.msra.mxu0 0
        %1034 = vmatprep.subr.bf16.mxu0 0
        %1035 = vmatpush1.bf16.msra.mxu0 0
        %1036 = vmatprep.subr.bf16.mxu0 0
        %1037 = vmatpush1.bf16.msra.mxu0 0
        %1038 = vmatprep.subr.bf16.mxu0 0
        %1039 = vmatpush1.bf16.msra.mxu0 0
        %1040 = vmatprep.subr.bf16.mxu0 0
        %1041 = vmatpush1.bf16.msra.mxu0 0
        %1042 = vmatprep.subr.bf16.mxu0 0
        %1043 = vmatpush1.bf16.msra.mxu0 0
        %1044 = vmatprep.subr.bf16.mxu0 0
        %1045 = vmatpush1.bf16.msra.mxu0 0
        %1046 = vmatprep.subr.bf16.mxu0 0
        %1047 = vmatpush1.bf16.msra.mxu0 0
        %1048 = vmatprep.subr.bf16.mxu0 0
        %1049 = vmatpush1.bf16.msra.mxu0 0
        %1050 = vmatprep.subr.bf16.mxu0 0
        %1051 = vmatpush1.bf16.msra.mxu0 0
        %1052 = vmatprep.subr.bf16.mxu0 0
        %1053 = vmatpush1.bf16.msra.mxu0 0
        %1054 = vmatprep.mubr.bf16.mxu0 0
        %1055 = vmatmul.mubr.bf16.gmra.mrb[0].mxu0 %v1020
        %v1056 = vpop.f32.mrb[0].mxu0
        %v1057 = vadd.f32 0.0, %v1056
        %v1058 = vpop.f32.mrb[0].mxu0
        %v1059 = vpop.f32.mrb[0].mxu0
        %v1060 = vadd.f32 0.0, %v1059
        %v1061 = vpop.f32.mrb[0].mxu0
        %1062 = vdwg.mxu0
        %v1063 = vadd.f32 %v851, %v907
        %v1064 = vadd.f32 %v852, %v910
        %v1065 = vadd.f32 %v853, %v957
        %v1066 = vadd.f32 %v854, %v960
        %v1067 = vadd.f32 %v855, %v1007
        %v1068 = vadd.f32 %v856, %v1010
        %v1069 = vadd.f32 %v857, %v1057
        %v1070 = vadd.f32 %v858, %v1060
        %1071 = vst.msk [vmem:[#allocation4] sm:$0xff] %vm398, %v1063
        %1072 = vst.msk [vmem:[#allocation4 + $0x8] sm:$0xff] %vm398, %v1064
        %1073 = vst.msk [vmem:[#allocation4 + $0x10] sm:$0xff] %vm398, %v1065
        %1074 = vst.msk [vmem:[#allocation4 + $0x18] sm:$0xff] %vm398, %v1066
        %1075 = vst.msk [vmem:[#allocation4 + $0x20] sm:$0xff] %vm398, %v1067
        %1076 = vst.msk [vmem:[#allocation4 + $0x28] sm:$0xff] %vm398, %v1068
        %1077 = vst.msk [vmem:[#allocation4 + $0x30] sm:$0xff] %vm398, %v1069
        %1078 = vst.msk [vmem:[#allocation4 + $0x38] sm:$0xff] %vm398, %v1070
        %1079 = vst.msk [vmem:[#allocation2] sm:$0xff] %vm794, %v650
        %1080 = vst.msk [vmem:[#allocation2 + $0x8] sm:$0xff] %vm794, %v651
        %1081 = vst.msk [vmem:[#allocation2 + $0x10] sm:$0xff] %vm794, %v652
        %1082 = vst.msk [vmem:[#allocation2 + $0x18] sm:$0xff] %vm794, %v653
        %1083 = vst.msk [vmem:[#allocation2 + $0x20] sm:$0xff] %vm794, %v654
        %1084 = vst.msk [vmem:[#allocation2 + $0x28] sm:$0xff] %vm794, %v655
        %1085 = vst.msk [vmem:[#allocation2 + $0x30] sm:$0xff] %vm794, %v656
        %1086 = vst.msk [vmem:[#allocation2 + $0x38] sm:$0xff] %vm794, %v657
        // Predicated region
        $region45: #{multihead_self_attention.3} parent=39 // pred_check
          %p1087 = pneg %p334
        $region46: #{multihead_self_attention.3} parent=39 // pred_check_branch
          %1089 = sbr.rel (%p1087) target = $region48
        $region47: #{multihead_self_attention.3} parent=39 // pred_region
          %v1090 = vld [vmem:[#allocation3] sm:$0xff]
          %v1091 = vld [vmem:[#allocation3 + $0x8] sm:$0xff]
          %v1092 = vld [vmem:[#allocation3 + $0x10] sm:$0xff]
          %v1093 = vld [vmem:[#allocation3 + $0x18] sm:$0xff]
          %v1094 = vld [vmem:[#allocation3 + $0x20] sm:$0xff]
          %v1095 = vld [vmem:[#allocation3 + $0x28] sm:$0xff]
          %v1096 = vld [vmem:[#allocation3 + $0x30] sm:$0xff]
          %v1097 = vld [vmem:[#allocation3 + $0x38] sm:$0xff]
          %v1098 = vrcp.pop %v1090
          %v1099 = vrcp.pop %v1091
          %v1100 = vrcp.pop %v1092
          %v1101 = vrcp.pop %v1093
          %v1102 = vrcp.pop %v1094
          %v1103 = vrcp.pop %v1095
          %v1104 = vrcp.pop %v1096
          %v1105 = vrcp.pop %v1097
          %v1106 = vld [vmem:[#allocation4] sm:$0xff]
          %v1107 = vld [vmem:[#allocation4 + $0x8] sm:$0xff]
          %v1108 = vld [vmem:[#allocation4 + $0x10] sm:$0xff]
          %v1109 = vld [vmem:[#allocation4 + $0x18] sm:$0xff]
          %v1110 = vld [vmem:[#allocation4 + $0x20] sm:$0xff]
          %v1111 = vld [vmem:[#allocation4 + $0x28] sm:$0xff]
          %v1112 = vld [vmem:[#allocation4 + $0x30] sm:$0xff]
          %v1113 = vld [vmem:[#allocation4 + $0x38] sm:$0xff]
          %1115 = vset.pattern.permute.xlu0 0
          %1116 = vperm.xlu0 %1115, %v1098
          %v1117 = vpop.permute.xlu0 %1116
          %1120 = vset.pattern.permute.xlu0 0
          %1121 = vperm.xlu0 %1120, %v1099
          %v1122 = vpop.permute.xlu0 %1121
          %1125 = vset.pattern.permute.xlu0 0
          %1126 = vperm.xlu0 %1125, %v1100
          %v1127 = vpop.permute.xlu0 %1126
          %1130 = vset.pattern.permute.xlu0 0
          %1131 = vperm.xlu0 %1130, %v1101
          %v1132 = vpop.permute.xlu0 %1131
          %1135 = vset.pattern.permute.xlu0 0
          %1136 = vperm.xlu0 %1135, %v1102
          %v1137 = vpop.permute.xlu0 %1136
          %1140 = vset.pattern.permute.xlu0 0
          %1141 = vperm.xlu0 %1140, %v1103
          %v1142 = vpop.permute.xlu0 %1141
          %1145 = vset.pattern.permute.xlu0 0
          %1146 = vperm.xlu0 %1145, %v1104
          %v1147 = vpop.permute.xlu0 %1146
          %1150 = vset.pattern.permute.xlu0 0
          %1151 = vperm.xlu0 %1150, %v1105
          %v1152 = vpop.permute.xlu0 %1151
          %v1154 = vmul.f32 %v1106, %v1117
          %v1155 = vmul.f32 %v1107, %v1122
          %v1156 = vmul.f32 %v1108, %v1127
          %v1157 = vmul.f32 %v1109, %v1132
          %v1158 = vmul.f32 %v1110, %v1137
          %v1159 = vmul.f32 %v1111, %v1142
          %v1160 = vmul.f32 %v1112, %v1147
          %v1161 = vmul.f32 %v1113, %v1152
          %v1162 = vpack.c.bf16 %v1155, %v1154
          %v1163 = vpack.c.bf16 %v1157, %v1156
          %v1164 = vpack.c.bf16 %v1159, %v1158
          %v1165 = vpack.c.bf16 %v1161, %v1160
          %v1166 = vld [vmem:[%s3] sm:$0xf]
          %v1167 = vld [vmem:[%s3 + $0x4] sm:$0xf]
          %v1169 = vsel %vm398, %v1163, 0
          %vm1171 = vcmask 1043456
          %v1173 = vsel %vm1171, %v1167, 0
          %1175 = vmatprep.subr.bf16.mxu0 0
          %1176 = vmatpush1.bf16.msra.mxu0 %v1173
          %1177 = vmatprep.subr.bf16.mxu0 0
          %1178 = vmatpush1.bf16.msra.mxu0 0
          %1179 = vmatprep.subr.bf16.mxu0 0
          %1180 = vmatpush1.bf16.msra.mxu0 0
          %1181 = vmatprep.subr.bf16.mxu0 0
          %1182 = vmatpush1.bf16.msra.mxu0 0
          %1183 = vmatprep.subr.bf16.mxu0 0
          %1184 = vmatpush1.bf16.msra.mxu0 0
          %1185 = vmatprep.subr.bf16.mxu0 0
          %1186 = vmatpush1.bf16.msra.mxu0 0
          %1187 = vmatprep.subr.bf16.mxu0 0
          %1188 = vmatpush1.bf16.msra.mxu0 0
          %1189 = vmatprep.subr.bf16.mxu0 0
          %1190 = vmatpush1.bf16.msra.mxu0 0
          %1191 = vmatprep.subr.bf16.mxu0 0
          %1192 = vmatpush1.bf16.msra.mxu0 0
          %1193 = vmatprep.subr.bf16.mxu0 0
          %1194 = vmatpush1.bf16.msra.mxu0 0
          %1195 = vmatprep.subr.bf16.mxu0 0
          %1196 = vmatpush1.bf16.msra.mxu0 0
          %1197 = vmatprep.subr.bf16.mxu0 0
          %1198 = vmatpush1.bf16.msra.mxu0 0
          %1199 = vmatprep.subr.bf16.mxu0 0
          %1200 = vmatpush1.bf16.msra.mxu0 0
          %1201 = vmatprep.subr.bf16.mxu0 0
          %1202 = vmatpush1.bf16.msra.mxu0 0
          %1203 = vmatprep.subr.bf16.mxu0 0
          %1204 = vmatpush1.bf16.msra.mxu0 0
          %1205 = vmatprep.subr.bf16.mxu0 0
          %1206 = vmatpush1.bf16.msra.mxu0 0
          %1207 = vmatprep.mubr.bf16.mxu0 0
          %1208 = vmatmul.mubr.bf16.gmra.mrb[0].mxu0 %v1169
          %v1209 = vpop.f32.mrb[0].mxu0
          %v1210 = vadd.f32 0.0, %v1209
          %v1211 = vpop.f32.mrb[0].mxu0
          %v1212 = vpop.f32.mrb[0].mxu0
          %v1213 = vadd.f32 0.0, %v1212
          %v1214 = vpop.f32.mrb[0].mxu0
          %1215 = vdwg.mxu0
          %v1217 = vsel %vm398, %v1162, 0
          %v1220 = vsel %vm1171, %v1166, 0
          %1222 = vmatprep.subr.bf16.mxu0 0
          %1223 = vmatpush1.bf16.msra.mxu0 %v1220
          %1224 = vmatprep.subr.bf16.mxu0 0
          %1225 = vmatpush1.bf16.msra.mxu0 0
          %1226 = vmatprep.subr.bf16.mxu0 0
          %1227 = vmatpush1.bf16.msra.mxu0 0
          %1228 = vmatprep.subr.bf16.mxu0 0
          %1229 = vmatpush1.bf16.msra.mxu0 0
          %1230 = vmatprep.subr.bf16.mxu0 0
          %1231 = vmatpush1.bf16.msra.mxu0 0
          %1232 = vmatprep.subr.bf16.mxu0 0
          %1233 = vmatpush1.bf16.msra.mxu0 0
          %1234 = vmatprep.subr.bf16.mxu0 0
          %1235 = vmatpush1.bf16.msra.mxu0 0
          %1236 = vmatprep.subr.bf16.mxu0 0
          %1237 = vmatpush1.bf16.msra.mxu0 0
          %1238 = vmatprep.subr.bf16.mxu0 0
          %1239 = vmatpush1.bf16.msra.mxu0 0
          %1240 = vmatprep.subr.bf16.mxu0 0
          %1241 = vmatpush1.bf16.msra.mxu0 0
          %1242 = vmatprep.subr.bf16.mxu0 0
          %1243 = vmatpush1.bf16.msra.mxu0 0
          %1244 = vmatprep.subr.bf16.mxu0 0
          %1245 = vmatpush1.bf16.msra.mxu0 0
          %1246 = vmatprep.subr.bf16.mxu0 0
          %1247 = vmatpush1.bf16.msra.mxu0 0
          %1248 = vmatprep.subr.bf16.mxu0 0
          %1249 = vmatpush1.bf16.msra.mxu0 0
          %1250 = vmatprep.subr.bf16.mxu0 0
          %1251 = vmatpush1.bf16.msra.mxu0 0
          %1252 = vmatprep.subr.bf16.mxu0 0
          %1253 = vmatpush1.bf16.msra.mxu0 0
          %1254 = vmatprep.mubr.bf16.mxu0 0
          %1255 = vmatmul.mubr.bf16.gmra.mrb[0].mxu0 %v1217
          %v1256 = vpop.f32.mrb[0].mxu0
          %v1257 = vadd.f32 %v1210, %v1256
          %v1258 = vpop.f32.mrb[0].mxu0
          %v1259 = vpop.f32.mrb[0].mxu0
          %v1260 = vadd.f32 %v1213, %v1259
          %v1261 = vpop.f32.mrb[0].mxu0
          %1262 = vdwg.mxu0
          %v1263 = vld [vmem:[%s3 + $0x8] sm:$0xf]
          %v1265 = vsel %vm398, %v1164, 0
          %v1268 = vsel %vm1171, %v1263, 0
          %1270 = vmatprep.subr.bf16.mxu0 0
          %1271 = vmatpush1.bf16.msra.mxu0 %v1268
          %1272 = vmatprep.subr.bf16.mxu0 0
          %1273 = vmatpush1.bf16.msra.mxu0 0
          %1274 = vmatprep.subr.bf16.mxu0 0
          %1275 = vmatpush1.bf16.msra.mxu0 0
          %1276 = vmatprep.subr.bf16.mxu0 0
          %1277 = vmatpush1.bf16.msra.mxu0 0
          %1278 = vmatprep.subr.bf16.mxu0 0
          %1279 = vmatpush1.bf16.msra.mxu0 0
          %1280 = vmatprep.subr.bf16.mxu0 0
          %1281 = vmatpush1.bf16.msra.mxu0 0
          %1282 = vmatprep.subr.bf16.mxu0 0
          %1283 = vmatpush1.bf16.msra.mxu0 0
          %1284 = vmatprep.subr.bf16.mxu0 0
          %1285 = vmatpush1.bf16.msra.mxu0 0
          %1286 = vmatprep.subr.bf16.mxu0 0
          %1287 = vmatpush1.bf16.msra.mxu0 0
          %1288 = vmatprep.subr.bf16.mxu0 0
          %1289 = vmatpush1.bf16.msra.mxu0 0
          %1290 = vmatprep.subr.bf16.mxu0 0
          %1291 = vmatpush1.bf16.msra.mxu0 0
          %1292 = vmatprep.subr.bf16.mxu0 0
          %1293 = vmatpush1.bf16.msra.mxu0 0
          %1294 = vmatprep.subr.bf16.mxu0 0
          %1295 = vmatpush1.bf16.msra.mxu0 0
          %1296 = vmatprep.subr.bf16.mxu0 0
          %1297 = vmatpush1.bf16.msra.mxu0 0
          %1298 = vmatprep.subr.bf16.mxu0 0
          %1299 = vmatpush1.bf16.msra.mxu0 0
          %1300 = vmatprep.subr.bf16.mxu0 0
          %1301 = vmatpush1.bf16.msra.mxu0 0
          %1302 = vmatprep.mubr.bf16.mxu0 0
          %1303 = vmatmul.mubr.bf16.gmra.mrb[0].mxu0 %v1265
          %v1304 = vpop.f32.mrb[0].mxu0
          %v1305 = vadd.f32 0.0, %v1304
          %v1306 = vpop.f32.mrb[0].mxu0
          %v1307 = vpop.f32.mrb[0].mxu0
          %v1308 = vadd.f32 0.0, %v1307
          %v1309 = vpop.f32.mrb[0].mxu0
          %1310 = vdwg.mxu0
          %v1311 = vadd.f32 %v1257, %v1305
          %v1312 = vadd.f32 %v1260, %v1308
          %v1313 = vld [vmem:[%s3 + $0xc] sm:$0xf]
          %v1315 = vsel %vm398, %v1165, 0
          %v1318 = vsel %vm1171, %v1313, 0
          %1320 = vmatprep.subr.bf16.mxu0 0
          %1321 = vmatpush1.bf16.msra.mxu0 %v1318
          %1322 = vmatprep.subr.bf16.mxu0 0
          %1323 = vmatpush1.bf16.msra.mxu0 0
          %1324 = vmatprep.subr.bf16.mxu0 0
          %1325 = vmatpush1.bf16.msra.mxu0 0
          %1326 = vmatprep.subr.bf16.mxu0 0
          %1327 = vmatpush1.bf16.msra.mxu0 0
          %1328 = vmatprep.subr.bf16.mxu0 0
          %1329 = vmatpush1.bf16.msra.mxu0 0
          %1330 = vmatprep.subr.bf16.mxu0 0
          %1331 = vmatpush1.bf16.msra.mxu0 0
          %1332 = vmatprep.subr.bf16.mxu0 0
          %1333 = vmatpush1.bf16.msra.mxu0 0
          %1334 = vmatprep.subr.bf16.mxu0 0
          %1335 = vmatpush1.bf16.msra.mxu0 0
          %1336 = vmatprep.subr.bf16.mxu0 0
          %1337 = vmatpush1.bf16.msra.mxu0 0
          %1338 = vmatprep.subr.bf16.mxu0 0
          %1339 = vmatpush1.bf16.msra.mxu0 0
          %1340 = vmatprep.subr.bf16.mxu0 0
          %1341 = vmatpush1.bf16.msra.mxu0 0
          %1342 = vmatprep.subr.bf16.mxu0 0
          %1343 = vmatpush1.bf16.msra.mxu0 0
          %1344 = vmatprep.subr.bf16.mxu0 0
          %1345 = vmatpush1.bf16.msra.mxu0 0
          %1346 = vmatprep.subr.bf16.mxu0 0
          %1347 = vmatpush1.bf16.msra.mxu0 0
          %1348 = vmatprep.subr.bf16.mxu0 0
          %1349 = vmatpush1.bf16.msra.mxu0 0
          %1350 = vmatprep.subr.bf16.mxu0 0
          %1351 = vmatpush1.bf16.msra.mxu0 0
          %1352 = vmatprep.mubr.bf16.mxu0 0
          %1353 = vmatmul.mubr.bf16.gmra.mrb[0].mxu0 %v1315
          %v1354 = vpop.f32.mrb[0].mxu0
          %v1355 = vadd.f32 0.0, %v1354
          %v1356 = vpop.f32.mrb[0].mxu0
          %v1357 = vpop.f32.mrb[0].mxu0
          %v1358 = vadd.f32 0.0, %v1357
          %v1359 = vpop.f32.mrb[0].mxu0
          %1360 = vdwg.mxu0
          %v1361 = vadd.f32 %v1311, %v1355
          %v1362 = vadd.f32 %v1312, %v1358
          %v1363 = vld [vmem:[%s4] sm:$0x1]
          %v1365 = vlaneseq
          %v1366 = vshrl.u32 %v1365, 7
          %v1367 = vsub.s32 0, %v1366
          %v1368 = vrot.slane %v1363, %v1367
          %v1370 = vadd.f32 %v1361, %v1368
          %v1371 = vadd.f32 %v1362, %v1368
          %vm1372 = vcmask 261120
          %1373 = vst.msk [vmem:[%s301] sm:$0xff] %vm1372, %v1370
          %1374 = vst.msk [vmem:[%s301 + $0x8] sm:$0xff] %vm1372, %v1371
        $region48: #{multihead_self_attention.3} parent=39 // pred_fallthru
          _
        %s1375 = sand.u32 %s174, 1
        %s1376 = scalar_lea.sflag [#allocation6], %s1375
        %s1377 = sand.u32 %s174, 1
        %s1378 = smul.addr %s1377, 16
        %s1379 = scalar_lea.vmem [#allocation5], %s1378
        // Predicated region
        $region49: #{multihead_self_attention.3} parent=39 // pred_check
          %p1380 = pneg %p184
        $region50: #{multihead_self_attention.3} parent=39 // pred_check_branch
          %1382 = sbr.rel (%p1380) target = $region52
        $region51: #{multihead_self_attention.3} parent=39 // pred_region
          %s1383 = smul.u32 2, %s25
          %s1385 = ssub.s32 256, 256
          %1386 = vsyncadd %s1376, %s1385
          %s1387 = smul.addr %s24, 2
          %s1388 = sadd.s32 %s1383, %s1387
          %s1389 = smul.addr %s1388, 128
          %s1390 = scalar_lea.hbm %s5, %s1389
          %s1391 = sshll.u32 %s1379, 4
          %s1392 = int_to_ptr.vmem [resolvable:$true] %s1391
          %1397 = dma.vmem_to_hbm [thread:$0]  %s1392, 256, %s1390, %s1376, 128, 128, 8
        $region52: #{multihead_self_attention.3} parent=39 // pred_fallthru
          _
      $region40: #{multihead_self_attention.3} parent=5 // pred_fallthru
        _
      %p1398 = scmp.le.s32.totalorder 2, %s14
      // Predicated region
      $region53: #{multihead_self_attention.3} parent=5 // pred_check
        %p1399 = pneg %p1398
      $region54: #{multihead_self_attention.3} parent=5 // pred_check_branch
        %1401 = sbr.rel (%p1399) target = $region56
      $region55: #{multihead_self_attention.3} parent=5 // pred_region
        %s1402 = ssub.s32 %s14, 2
        // Predicated region
        $region57: #{multihead_self_attention.3} parent=55 // pred_check
          %p1403 = pneg %p190
        $region58: #{multihead_self_attention.3} parent=55 // pred_check_branch
          %1405 = sbr.rel (%p1403) target = $region60
        $region59: #{multihead_self_attention.3} parent=55 // pred_region
          %s1406 = sand.u32 %s175, 1
          %s1407 = scalar_lea.sflag [#allocation6], %s1406
          %s1408 = sand.u32 %s175, 1
          %s1409 = smul.addr %s1408, 16
          %s1410 = scalar_lea.vmem [#allocation5], %s1409
          %1411 = dma.done %s1407, 256
        $region60: #{multihead_self_attention.3} parent=55 // pred_fallthru
          _
      $region56: #{multihead_self_attention.3} parent=5 // pred_fallthru
        _
    $region6: #{multihead_self_attention.3} parent=1 // loop_footer
      %s18 = sadd.s32 1, %s14
    $region7: #{multihead_self_attention.3} parent=1 // loop_footer_branch
      %13 = sbr.rel target = $region3
    $region8: #{multihead_self_attention.3} parent=1 // loop_exit
      _
    %1412 = vsyncpa [#allocation6], 1
    %s1413 = scalar_lea.sflag [#allocation6], 1
    %1414 = vsyncpa %s1413, 1

</llo_original>
